<compile_context>
chip_gen: v7x
topology: tpu7x:2x2x1
jax: 0.10.0
libtpu: 0.0.40
codegen_flags: <defaults>
</compile_context>

<pallas_src>
import functools

import jax
import jax.numpy as jnp
import numpy as np
from jax.experimental import pallas as pl
from jax.experimental.pallas import tpu as pltpu


# ---------------------------------------------------------------------------
# Fused kernel: depthwise 3x3 conv (+BN0+ReLU) -> 1x1 expand (+BN1+ReLU)
#               -> global avg pool -> 1x1 fc (+bias)
# ---------------------------------------------------------------------------
def _fused_early_exit_kernel(x_ref, dwm_ref, b0_ref, w1_ref, b1_ref,
                             fcw_ref, fcb_ref, o_ref, *, W, HW):
    # x_ref:   (1, Cin, HW)   one batch element; Cin on sublanes, HW on lanes
    # dwm_ref: (9, Cin, HW)   depthwise taps * bn0_scale * per-tap boundary mask
    # b0_ref:  (Cin, 1)       folded BN0 bias
    # w1_ref:  (Cout, Cin)    expand conv weight^T, pre-scaled by bn1_scale
    # b1_ref:  (Cout, 1)      folded BN1 bias
    # fcw_ref: (ncls, Cout)   fc conv weight^T
    # fcb_ref: (ncls, 1)      fc bias
    # o_ref:   (1, ncls, 1)
    x = x_ref[0]                                             # (Cin, HW) f32

    # ---- depthwise 3x3 "same" conv, 9 taps as lane rotations of flattened HW.
    # Boundary (zero-pad) handling is folded into the masked weights, so each
    # tap is just: roll (XLU) * weight (VPU) + add (VPU).
    acc = x * dwm_ref[4]                                     # center tap (no shift)
    for t in range(9):
        if t == 4:
            continue
        dy, dx = t // 3, t % 3
        off = (dy - 1) * W + (dx - 1)                        # flat source offset
        shifted = pltpu.roll(x, shift=(-off) % HW, axis=1)   # XLU lane rotation
        acc = acc + shifted * dwm_ref[t]
    y0 = jnp.maximum(acc + b0_ref[...], 0.0)                 # BN0 bias + ReLU

    # ---- 1x1 expand conv as MXU matmul (bn1 scale already folded into w1).
    z = jnp.dot(w1_ref[...], y0, preferred_element_type=jnp.float32)  # (Cout, HW)
    z = jnp.maximum(z + b1_ref[...], 0.0)                    # BN1 bias + ReLU

    # ---- global avg pool + 1x1 fc, fused:  mean_p( fc_w^T @ z ) + b
    t2 = jnp.dot(fcw_ref[...], z, preferred_element_type=jnp.float32)  # (ncls, HW)
    logits = jnp.sum(t2, axis=1, keepdims=True) * (1.0 / HW) + fcb_ref[...]
    o_ref[...] = logits[None].astype(o_ref.dtype)            # (1, ncls, 1)


# ---------------------------------------------------------------------------
# Wrapper
# ---------------------------------------------------------------------------
def early_exit_block(x_nchw, params):
    """Forward pass of EarlyExitBlock.  x_nchw: (N, Cin, H, W) float32."""
    dw_w = params["dw_w"]              # (9, Cin)   taps flattened as dy*3+dx
    bn0_scale = params["bn0_scale"]    # (Cin,)
    bn0_bias = params["bn0_bias"]      # (Cin,)
    pw_w = params["pw_w"]              # (Cin, Cout)
    bn1_scale = params["bn1_scale"]    # (Cout,)
    bn1_bias = params["bn1_bias"]      # (Cout,)
    fc_w = params["fc_w"]              # (Cout, n_classes)
    fc_b = params["fc_b"]              # (n_classes,)

    N, Cin, H, Wd = x_nchw.shape
    HW = H * Wd
    Cout = pw_w.shape[1]
    ncls = fc_w.shape[1]

    # Free reshape (no transpose, no pad): channels on sublanes, HW on lanes.
    x3 = x_nchw.reshape(N, Cin, HW).astype(jnp.float32)

    # Per-tap boundary masks for "same" 3x3 padding in the flattened layout,
    # folded with bn0_scale into the depthwise taps (done once in XLA).
    h_idx = jnp.arange(HW, dtype=jnp.int32) // Wd
    w_idx = jnp.arange(HW, dtype=jnp.int32) % Wd
    masks = []
    for dy in range(3):
        for dx in range(3):
            ok_h = (h_idx + (dy - 1) >= 0) & (h_idx + (dy - 1) < H)
            ok_w = (w_idx + (dx - 1) >= 0) & (w_idx + (dx - 1) < Wd)
            masks.append((ok_h & ok_w).astype(jnp.float32))
    mask = jnp.stack(masks)                                        # (9, HW)
    dwm = (dw_w * bn0_scale[None, :])[:, :, None] * mask[:, None, :]  # (9,Cin,HW)

    w1s = (pw_w * bn1_scale[None, :]).T                            # (Cout, Cin)
    fcw_t = fc_w.T                                                 # (ncls, Cout)
    b0c = bn0_bias[:, None]                                        # (Cin, 1)
    b1c = bn1_bias[:, None]                                        # (Cout, 1)
    fcbc = fc_b[:, None]                                           # (ncls, 1)

    kernel = functools.partial(_fused_early_exit_kernel, W=Wd, HW=HW)

    out = pl.pallas_call(
        kernel,
        out_shape=jax.ShapeDtypeStruct((N, ncls, 1), jnp.float32),
        grid_spec=pltpu.PrefetchScalarGridSpec(
            num_scalar_prefetch=0,
            grid=(N,),
            in_specs=[
                pl.BlockSpec((1, Cin, HW), lambda b: (b, 0, 0)),
                pl.BlockSpec((9, Cin, HW), lambda b: (0, 0, 0)),   # resident
                pl.BlockSpec((Cin, 1), lambda b: (0, 0)),
                pl.BlockSpec((Cout, Cin), lambda b: (0, 0)),
                pl.BlockSpec((Cout, 1), lambda b: (0, 0)),
                pl.BlockSpec((ncls, Cout), lambda b: (0, 0)),
                pl.BlockSpec((ncls, 1), lambda b: (0, 0)),
            ],
            out_specs=pl.BlockSpec((1, ncls, 1), lambda b: (b, 0, 0)),
        ),
        compiler_params=pltpu.CompilerParams(
            dimension_semantics=("parallel",)),
    )(x3, dwm, b0c, w1s, b1c, fcw_t, fcbc)

    # PyTorch: self._fc(x).squeeze() on (N, n_classes, 1, 1) -> (N, n_classes)
    return out.reshape(N, ncls)


# ---------------------------------------------------------------------------
# Pure-JAX reference (for numerical sanity check)
# ---------------------------------------------------------------------------
def reference(x_nchw, params):
    x = jnp.transpose(x_nchw, (0, 2, 3, 1)).astype(jnp.float32)
    N, H, W, Cin = x.shape
    xp = jnp.pad(x, ((0, 0), (1, 1), (1, 1), (0, 0)))
    acc = jnp.zeros_like(x)
    for dy in range(3):
        for dx in range(3):
            acc = acc + xp[:, dy:dy + H, dx:dx + W, :] * params["dw_w"][dy * 3 + dx]
    y = jnp.maximum(acc * params["bn0_scale"] + params["bn0_bias"], 0.0)
    y = jnp.einsum("nhwc,cd->nhwd", y, params["pw_w"],
                   precision=jax.lax.Precision.HIGHEST)
    y = jnp.maximum(y * params["bn1_scale"] + params["bn1_bias"], 0.0)
    pooled = jnp.mean(y, axis=(1, 2))
    return jnp.dot(pooled, params["fc_w"],
                   precision=jax.lax.Precision.HIGHEST) + params["fc_b"]


# ---------------------------------------------------------------------------
# Deterministic parameter init (synthetic; shapes match EarlyExitBlock.__init__)
# ---------------------------------------------------------------------------
def make_params(key, in_channels, final_channels, num_classes, eps=1e-5):
    ks = jax.random.split(key, 12)

    dw_w = 0.1 * jax.random.normal(ks[0], (9, in_channels), jnp.float32)
    pw_w = 0.1 * jax.random.normal(ks[1], (in_channels, final_channels), jnp.float32)
    fc_w = 0.1 * jax.random.normal(ks[2], (final_channels, num_classes), jnp.float32)
    fc_b = 0.1 * jax.random.normal(ks[3], (num_classes,), jnp.float32)

    # BatchNorm (inference) statistics/affine, folded into scale & bias.
    g0 = 1.0 + 0.1 * jax.random.normal(ks[4], (in_channels,), jnp.float32)
    b0 = 0.1 * jax.random.normal(ks[5], (in_channels,), jnp.float32)
    m0 = 0.1 * jax.random.normal(ks[6], (in_channels,), jnp.float32)
    v0 = 0.5 + jnp.abs(jax.random.normal(ks[7], (in_channels,), jnp.float32))
    bn0_scale = g0 / jnp.sqrt(v0 + eps)
    bn0_bias = b0 - m0 * bn0_scale

    g1 = 1.0 + 0.1 * jax.random.normal(ks[8], (final_channels,), jnp.float32)
    b1 = 0.1 * jax.random.normal(ks[9], (final_channels,), jnp.float32)
    m1 = 0.1 * jax.random.normal(ks[10], (final_channels,), jnp.float32)
    v1 = 0.5 + jnp.abs(jax.random.normal(ks[11], (final_channels,), jnp.float32))
    bn1_scale = g1 / jnp.sqrt(v1 + eps)
    bn1_bias = b1 - m1 * bn1_scale

    return dict(dw_w=dw_w, bn0_scale=bn0_scale, bn0_bias=bn0_bias,
                pw_w=pw_w, bn1_scale=bn1_scale, bn1_bias=bn1_bias,
                fc_w=fc_w, fc_b=fc_b)


if __name__ == "__main__":
    # Small shapes consistent with the module defaults (in=40, final=150).
    N, Cin, H, W = 2, 40, 16, 16
    Cout, NUM_CLASSES = 150, 10

    key = jax.random.PRNGKey(0)
    k_x, k_p = jax.random.split(key)
    x = jax.random.normal(k_x, (N, Cin, H, W), jnp.float32)   # NCHW like PyTorch
    params = make_params(k_p, Cin, Cout, NUM_CLASSES)

    out = jax.block_until_ready(early_exit_block(x, params))
    ref = jax.block_until_ready(reference(x, params))

    np.testing.assert_allclose(np.asarray(out), np.asarray(ref),
                               rtol=2e-4, atol=2e-4)
    assert out.shape == (N, NUM_CLASSES)

    print("KERNEL_OK")
</pallas_src>

<mosaic_0001>
module attributes {stable_mosaic.version = 11 : i64} {
  func.func @_fused_early_exit_kernel(%arg0: i32, %arg1: memref<1x40x256xf32, #tpu.memory_space<vmem>>, %arg2: memref<9x40x256xf32, #tpu.memory_space<vmem>>, %arg3: memref<40x1xf32, #tpu.memory_space<vmem>>, %arg4: memref<150x40xf32, #tpu.memory_space<vmem>>, %arg5: memref<150x1xf32, #tpu.memory_space<vmem>>, %arg6: memref<10x150xf32, #tpu.memory_space<vmem>>, %arg7: memref<10x1xf32, #tpu.memory_space<vmem>>, %arg8: memref<1x10x1xf32, #tpu.memory_space<vmem>>) attributes {dimension_semantics = [#tpu.dimension_semantics<parallel>], iteration_bounds = array<i64: 2>, scalar_prefetch = 0 : i64, scratch_operands = 0 : i64, tpu.core_type = #tpu.core_type<tc>, window_params = [{transform_indices = @transform_0, window_bounds = array<i64: 1, 40, 256>}, {pipeline_mode = #tpu.pipeline_mode<synchronous>, transform_indices = @transform_1, window_bounds = array<i64: 9, 40, 256>}, {pipeline_mode = #tpu.pipeline_mode<synchronous>, transform_indices = @transform_2, window_bounds = array<i64: 40, 1>}, {pipeline_mode = #tpu.pipeline_mode<synchronous>, transform_indices = @transform_3, window_bounds = array<i64: 150, 40>}, {pipeline_mode = #tpu.pipeline_mode<synchronous>, transform_indices = @transform_4, window_bounds = array<i64: 150, 1>}, {pipeline_mode = #tpu.pipeline_mode<synchronous>, transform_indices = @transform_5, window_bounds = array<i64: 10, 150>}, {pipeline_mode = #tpu.pipeline_mode<synchronous>, transform_indices = @transform_6, window_bounds = array<i64: 10, 1>}, {transform_indices = @transform_7, window_bounds = array<i64: 1, 10, 1>}]} {
    %c0 = arith.constant 0 : index
    %c0_0 = arith.constant 0 : index
    %c0_1 = arith.constant 0 : index
    %0 = vector.load %arg1[%c0, %c0_0, %c0_1] : memref<1x40x256xf32, #tpu.memory_space<vmem>>, vector<1x40x256xf32>
    %1 = vector.shape_cast %0 : vector<1x40x256xf32> to vector<40x256xf32>
    %c4 = arith.constant 4 : index
    %c0_2 = arith.constant 0 : index
    %c0_3 = arith.constant 0 : index
    %2 = vector.load %arg2[%c4, %c0_2, %c0_3] : memref<9x40x256xf32, #tpu.memory_space<vmem>>, vector<1x40x256xf32>
    %3 = vector.shape_cast %2 : vector<1x40x256xf32> to vector<40x256xf32>
    %4 = arith.mulf %1, %3 : vector<40x256xf32>
    %c17_i32 = arith.constant 17 : i32
    %5 = tpu.dynamic_rotate %1 by %c17_i32 dim 1 : vector<40x256xf32>, i32 -> vector<40x256xf32>
    %c0_4 = arith.constant 0 : index
    %c0_5 = arith.constant 0 : index
    %c0_6 = arith.constant 0 : index
    %6 = vector.load %arg2[%c0_4, %c0_5, %c0_6] : memref<9x40x256xf32, #tpu.memory_space<vmem>>, vector<1x40x256xf32>
    %7 = vector.shape_cast %6 : vector<1x40x256xf32> to vector<40x256xf32>
    %8 = arith.mulf %5, %7 : vector<40x256xf32>
    %9 = arith.addf %4, %8 : vector<40x256xf32>
    %c16_i32 = arith.constant 16 : i32
    %10 = tpu.dynamic_rotate %1 by %c16_i32 dim 1 : vector<40x256xf32>, i32 -> vector<40x256xf32>
    %c1 = arith.constant 1 : index
    %c0_7 = arith.constant 0 : index
    %c0_8 = arith.constant 0 : index
    %11 = vector.load %arg2[%c1, %c0_7, %c0_8] : memref<9x40x256xf32, #tpu.memory_space<vmem>>, vector<1x40x256xf32>
    %12 = vector.shape_cast %11 : vector<1x40x256xf32> to vector<40x256xf32>
    %13 = arith.mulf %10, %12 : vector<40x256xf32>
    %14 = arith.addf %9, %13 : vector<40x256xf32>
    %c15_i32 = arith.constant 15 : i32
    %15 = tpu.dynamic_rotate %1 by %c15_i32 dim 1 : vector<40x256xf32>, i32 -> vector<40x256xf32>
    %c2 = arith.constant 2 : index
    %c0_9 = arith.constant 0 : index
    %c0_10 = arith.constant 0 : index
    %16 = vector.load %arg2[%c2, %c0_9, %c0_10] : memref<9x40x256xf32, #tpu.memory_space<vmem>>, vector<1x40x256xf32>
    %17 = vector.shape_cast %16 : vector<1x40x256xf32> to vector<40x256xf32>
    %18 = arith.mulf %15, %17 : vector<40x256xf32>
    %19 = arith.addf %14, %18 : vector<40x256xf32>
    %c1_i32 = arith.constant 1 : i32
    %20 = tpu.dynamic_rotate %1 by %c1_i32 dim 1 : vector<40x256xf32>, i32 -> vector<40x256xf32>
    %c3 = arith.constant 3 : index
    %c0_11 = arith.constant 0 : index
    %c0_12 = arith.constant 0 : index
    %21 = vector.load %arg2[%c3, %c0_11, %c0_12] : memref<9x40x256xf32, #tpu.memory_space<vmem>>, vector<1x40x256xf32>
    %22 = vector.shape_cast %21 : vector<1x40x256xf32> to vector<40x256xf32>
    %23 = arith.mulf %20, %22 : vector<40x256xf32>
    %24 = arith.addf %19, %23 : vector<40x256xf32>
    %c255_i32 = arith.constant 255 : i32
    %25 = tpu.dynamic_rotate %1 by %c255_i32 dim 1 : vector<40x256xf32>, i32 -> vector<40x256xf32>
    %c5 = arith.constant 5 : index
    %c0_13 = arith.constant 0 : index
    %c0_14 = arith.constant 0 : index
    %26 = vector.load %arg2[%c5, %c0_13, %c0_14] : memref<9x40x256xf32, #tpu.memory_space<vmem>>, vector<1x40x256xf32>
    %27 = vector.shape_cast %26 : vector<1x40x256xf32> to vector<40x256xf32>
    %28 = arith.mulf %25, %27 : vector<40x256xf32>
    %29 = arith.addf %24, %28 : vector<40x256xf32>
    %c241_i32 = arith.constant 241 : i32
    %30 = tpu.dynamic_rotate %1 by %c241_i32 dim 1 : vector<40x256xf32>, i32 -> vector<40x256xf32>
    %c6 = arith.constant 6 : index
    %c0_15 = arith.constant 0 : index
    %c0_16 = arith.constant 0 : index
    %31 = vector.load %arg2[%c6, %c0_15, %c0_16] : memref<9x40x256xf32, #tpu.memory_space<vmem>>, vector<1x40x256xf32>
    %32 = vector.shape_cast %31 : vector<1x40x256xf32> to vector<40x256xf32>
    %33 = arith.mulf %30, %32 : vector<40x256xf32>
    %34 = arith.addf %29, %33 : vector<40x256xf32>
    %c240_i32 = arith.constant 240 : i32
    %35 = tpu.dynamic_rotate %1 by %c240_i32 dim 1 : vector<40x256xf32>, i32 -> vector<40x256xf32>
    %c7 = arith.constant 7 : index
    %c0_17 = arith.constant 0 : index
    %c0_18 = arith.constant 0 : index
    %36 = vector.load %arg2[%c7, %c0_17, %c0_18] : memref<9x40x256xf32, #tpu.memory_space<vmem>>, vector<1x40x256xf32>
    %37 = vector.shape_cast %36 : vector<1x40x256xf32> to vector<40x256xf32>
    %38 = arith.mulf %35, %37 : vector<40x256xf32>
    %39 = arith.addf %34, %38 : vector<40x256xf32>
    %c239_i32 = arith.constant 239 : i32
    %40 = tpu.dynamic_rotate %1 by %c239_i32 dim 1 : vector<40x256xf32>, i32 -> vector<40x256xf32>
    %c8 = arith.constant 8 : index
    %c0_19 = arith.constant 0 : index
    %c0_20 = arith.constant 0 : index
    %41 = vector.load %arg2[%c8, %c0_19, %c0_20] : memref<9x40x256xf32, #tpu.memory_space<vmem>>, vector<1x40x256xf32>
    %42 = vector.shape_cast %41 : vector<1x40x256xf32> to vector<40x256xf32>
    %43 = arith.mulf %40, %42 : vector<40x256xf32>
    %44 = arith.addf %39, %43 : vector<40x256xf32>
    %c0_21 = arith.constant 0 : index
    %c0_22 = arith.constant 0 : index
    %45 = vector.load %arg3[%c0_21, %c0_22] : memref<40x1xf32, #tpu.memory_space<vmem>>, vector<40x1xf32>
    %46 = vector.broadcast %45 : vector<40x1xf32> to vector<40x256xf32>
    %47 = arith.addf %44, %46 : vector<40x256xf32>
    %cst = arith.constant 0.000000e+00 : f32
    %48 = vector.broadcast %cst : f32 to vector<40x256xf32>
    %49 = arith.maximumf %47, %48 : vector<40x256xf32>
    %c0_23 = arith.constant 0 : index
    %c0_24 = arith.constant 0 : index
    %50 = vector.load %arg4[%c0_23, %c0_24] : memref<150x40xf32, #tpu.memory_space<vmem>>, vector<150x40xf32>
    %cst_25 = arith.constant dense<0.000000e+00> : vector<150x256xf32>
    %51 = tpu.matmul %50, %49, %cst_25 {dimension_numbers = #tpu.dot_dimension_numbers<[1], [0], [0], [1], [0, 0, 1, 1], [], []>} : vector<150x40xf32>, vector<40x256xf32>, vector<150x256xf32> -> vector<150x256xf32>
    %c0_26 = arith.constant 0 : index
    %c0_27 = arith.constant 0 : index
    %52 = vector.load %arg5[%c0_26, %c0_27] : memref<150x1xf32, #tpu.memory_space<vmem>>, vector<150x1xf32>
    %53 = vector.broadcast %52 : vector<150x1xf32> to vector<150x256xf32>
    %54 = arith.addf %51, %53 : vector<150x256xf32>
    %cst_28 = arith.constant 0.000000e+00 : f32
    %55 = vector.broadcast %cst_28 : f32 to vector<150x256xf32>
    %56 = arith.maximumf %54, %55 : vector<150x256xf32>
    %c0_29 = arith.constant 0 : index
    %c0_30 = arith.constant 0 : index
    %57 = vector.load %arg6[%c0_29, %c0_30] : memref<10x150xf32, #tpu.memory_space<vmem>>, vector<10x150xf32>
    %cst_31 = arith.constant dense<0.000000e+00> : vector<10x256xf32>
    %58 = tpu.matmul %57, %56, %cst_31 {dimension_numbers = #tpu.dot_dimension_numbers<[1], [0], [0], [1], [0, 0, 1, 1], [], []>} : vector<10x150xf32>, vector<150x256xf32>, vector<10x256xf32> -> vector<10x256xf32>
    %cst_32 = arith.constant dense<0.000000e+00> : vector<10xf32>
    %59 = vector.multi_reduction <add>, %58, %cst_32 [1] : vector<10x256xf32> to vector<10xf32>
    %60 = vector.shape_cast %59 : vector<10xf32> to vector<10x1xf32>
    %cst_33 = arith.constant 3.906250e-03 : f32
    %61 = vector.broadcast %cst_33 : f32 to vector<10x1xf32>
    %62 = arith.mulf %60, %61 : vector<10x1xf32>
    %c0_34 = arith.constant 0 : index
    %c0_35 = arith.constant 0 : index
    %63 = vector.load %arg7[%c0_34, %c0_35] : memref<10x1xf32, #tpu.memory_space<vmem>>, vector<10x1xf32>
    %64 = arith.addf %62, %63 : vector<10x1xf32>
    %65 = vector.shape_cast %64 : vector<10x1xf32> to vector<1x10x1xf32>
    %c0_36 = arith.constant 0 : index
    %c0_37 = arith.constant 0 : index
    %c0_38 = arith.constant 0 : index
    %66 = vector.load %arg8[%c0_36, %c0_37, %c0_38] : memref<1x10x1xf32, #tpu.memory_space<vmem>>, vector<1x10x1xf32>
    tpu.vector_store %arg8[%c0_36, %c0_37, %c0_38], %65 {strides = array<i32>} : memref<1x10x1xf32, #tpu.memory_space<vmem>>, vector<1x10x1xf32>,
    return
  }
  func.func @transform_0(%arg0: i32) -> (i32, i32, i32) {
    %c0_i32 = arith.constant 0 : i32
    %c0_i32_0 = arith.constant 0 : i32
    %c0_i32_1 = arith.constant 0 : i32
    return %arg0, %c0_i32, %c0_i32_0 : i32, i32, i32
  }
  func.func @transform_1(%arg0: i32) -> (i32, i32, i32) {
    %c0_i32 = arith.constant 0 : i32
    %c0_i32_0 = arith.constant 0 : i32
    %c0_i32_1 = arith.constant 0 : i32
    %c0_i32_2 = arith.constant 0 : i32
    return %c0_i32, %c0_i32_0, %c0_i32_1 : i32, i32, i32
  }
  func.func @transform_2(%arg0: i32) -> (i32, i32) {
    %c0_i32 = arith.constant 0 : i32
    %c0_i32_0 = arith.constant 0 : i32
    %c0_i32_1 = arith.constant 0 : i32
    return %c0_i32, %c0_i32_0 : i32, i32
  }
  func.func @transform_3(%arg0: i32) -> (i32, i32) {
    %c0_i32 = arith.constant 0 : i32
    %c0_i32_0 = arith.constant 0 : i32
    %c0_i32_1 = arith.constant 0 : i32
    return %c0_i32, %c0_i32_0 : i32, i32
  }
  func.func @transform_4(%arg0: i32) -> (i32, i32) {
    %c0_i32 = arith.constant 0 : i32
    %c0_i32_0 = arith.constant 0 : i32
    %c0_i32_1 = arith.constant 0 : i32
    return %c0_i32, %c0_i32_0 : i32, i32
  }
  func.func @transform_5(%arg0: i32) -> (i32, i32) {
    %c0_i32 = arith.constant 0 : i32
    %c0_i32_0 = arith.constant 0 : i32
    %c0_i32_1 = arith.constant 0 : i32
    return %c0_i32, %c0_i32_0 : i32, i32
  }
  func.func @transform_6(%arg0: i32) -> (i32, i32) {
    %c0_i32 = arith.constant 0 : i32
    %c0_i32_0 = arith.constant 0 : i32
    %c0_i32_1 = arith.constant 0 : i32
    return %c0_i32, %c0_i32_0 : i32, i32
  }
  func.func @transform_7(%arg0: i32) -> (i32, i32, i32) {
    %c0_i32 = arith.constant 0 : i32
    %c0_i32_0 = arith.constant 0 : i32
    %c0_i32_1 = arith.constant 0 : i32
    return %arg0, %c0_i32, %c0_i32_0 : i32, i32, i32
  }
}

</mosaic_0001>

<llo_original>
// kernel: tpu_custom_call.1
$region0: #{tpu_custom_call.1}
  #allocation0 [shape = 'u32[]', space=smem, size = 0x4, offset = 0x4, fixed_abs, tag = 'smem constant byte address 0x4 - core index']
  #allocation1 [shape = 'u32[144,128]{1,0:T(1,128)}', space=vmem, size = 0x12000, scoped, tag = 'internal scratch']
  %s0 = inlined_call_operand.vmem [shape: f32[2,40,256], index: 0, kind: input, shape index: {}]
  %s1 = inlined_call_operand.hbm [shape: f32[9,40,256], index: 1, kind: input, shape index: {}]
  %s2 = inlined_call_operand.vmem [shape: f32[40,1], index: 2, kind: input, shape index: {}]
  %s3 = inlined_call_operand.vmem [shape: f32[150,40], index: 3, kind: input, shape index: {}]
  %s4 = inlined_call_operand.vmem [shape: f32[150,1], index: 4, kind: input, shape index: {}]
  %s5 = inlined_call_operand.vmem [shape: f32[10,150], index: 5, kind: input, shape index: {}]
  %s6 = inlined_call_operand.vmem [shape: f32[10,1], index: 6, kind: input, shape index: {}]
  %s7 = inlined_call_operand.vmem [shape: f32[2,10,1], index: 7, kind: output, shape index: {}]
  %s8 = sld [smem:[#allocation0]]
  $region65: #{tpu_custom_call.1} parent=0
    _
  %s10 = ssub.s32 1, %s8
  %s11 = scalar_select 0, %s10, %s8
  $region1: #{tpu_custom_call.1} parent=0
    #allocation2 [shape = 'u8[368640]{0}', space=vmem, size = 0x5a000, scoped, tag = 'input window, operand 1, single buffered']
    #allocation3 [shape = 's32[2]{0}', space=sflag, size = 0x8, scoped, tag = 'scoped memory for tpu_custom_call.1']
    %12 = vsyncpa [#allocation3], 0
    loop: start=0, step=1, limit=4
    $region2: #{tpu_custom_call.1} parent=1 // loop_pre_header
      _
    $region3: #{tpu_custom_call.1} parent=1 // loop_header
      %s14 = sphi 0, %s18
      %p15 = scmp.ge.s32.totalorder %s14, 4
      %s24 = sphi 0, %s26
      %s27 = sphi 0, %s24
      %s28 = sphi 0, %s27
      %s44 = sphi 0, %s28
      %s48 = sphi 0, %s48
      %s50 = sphi 0, %s48
      %s51 = sphi 0, %s50
      %s65 = sphi 0, %s51
      %s69 = sphi 0, %s69
      %s71 = sphi 0, %s69
      %s72 = sphi 0, %s71
      %s86 = sphi 0, %s72
      %s90 = sphi 0, %s90
      %s92 = sphi 0, %s90
      %s93 = sphi 0, %s92
      %s107 = sphi 0, %s93
      %s111 = sphi 0, %s111
      %s113 = sphi 0, %s111
      %s114 = sphi 0, %s113
      %s128 = sphi 0, %s114
      %s132 = sphi 0, %s132
      %s134 = sphi 0, %s132
      %s135 = sphi 0, %s134
      %s149 = sphi 0, %s135
      %s153 = sphi 0, %s153
      %s155 = sphi 0, %s153
      %s156 = sphi 0, %s155
      %s170 = sphi 0, %s156
      %s176 = sphi 0, %s178
      %s179 = sphi 0, %s176
      %s180 = sphi 0, %s179
      %s196 = sphi 0, %s180
    $region4: #{tpu_custom_call.1} parent=1 // loop_header_branch
      %17 = sbr.rel (%p15) target = $region8
    $region5: #{tpu_custom_call.1} parent=1 // loop_body
      %s19 = ssub.s32 %s14, 1
      %s20 = ssub.s32 %s14, 2
      %s21 = sadd.s32 %s14, 1
      %s22 = ssub.s32 %s14, %s21
      %p23 = scmp.eq.s32.totalorder %s22, 0
      %s25 = sadd.s32 %s24, 1
      %s26 = scalar_select %p23, %s24, %s25
      %p29 = pneg %p23
      %p30 = scmp.eq.s32.totalorder %s14, 1
      %p31 = por %p29, %p30
      %p32 = scmp.ne.s32.totalorder %s24, %s27
      %p33 = scmp.eq.s32.totalorder %s14, 0
      %p34 = por %p32, %p33
      %p35 = scmp.ne.s32.totalorder %s24, %s27
      %p36 = scmp.eq.s32.totalorder %s19, 1
      %p37 = por %p35, %p36
      %p38 = scmp.ne.s32.totalorder %s27, %s28
      %p39 = scmp.eq.s32.totalorder %s19, 0
      %p40 = por %p38, %p39
      %p41 = scmp.ne.s32.totalorder %s27, %s28
      %p42 = scmp.eq.s32.totalorder %s20, 1
      %p43 = por %p41, %p42
      %p45 = scmp.ne.s32.totalorder %s28, %s44
      %p46 = scmp.eq.s32.totalorder %s20, 0
      %p47 = por %p45, %p46
      %s49 = sadd.s32 %s48, 1
      %p52 = scmp.eq.s32.totalorder %s14, 1
      %p53 = scmp.ne.s32.totalorder %s48, %s50
      %p54 = scmp.eq.s32.totalorder %s14, 0
      %p55 = por %p53, %p54
      %p56 = scmp.ne.s32.totalorder %s48, %s50
      %p57 = scmp.eq.s32.totalorder %s19, 1
      %p58 = por %p56, %p57
      %p59 = scmp.ne.s32.totalorder %s50, %s51
      %p60 = scmp.eq.s32.totalorder %s19, 0
      %p61 = por %p59, %p60
      %p62 = scmp.ne.s32.totalorder %s50, %s51
      %p63 = scmp.eq.s32.totalorder %s20, 1
      %p64 = por %p62, %p63
      %p66 = scmp.ne.s32.totalorder %s51, %s65
      %p67 = scmp.eq.s32.totalorder %s20, 0
      %p68 = por %p66, %p67
      %s70 = sadd.s32 %s69, 1
      %p73 = scmp.eq.s32.totalorder %s14, 1
      %p74 = scmp.ne.s32.totalorder %s69, %s71
      %p75 = scmp.eq.s32.totalorder %s14, 0
      %p76 = por %p74, %p75
      %p77 = scmp.ne.s32.totalorder %s69, %s71
      %p78 = scmp.eq.s32.totalorder %s19, 1
      %p79 = por %p77, %p78
      %p80 = scmp.ne.s32.totalorder %s71, %s72
      %p81 = scmp.eq.s32.totalorder %s19, 0
      %p82 = por %p80, %p81
      %p83 = scmp.ne.s32.totalorder %s71, %s72
      %p84 = scmp.eq.s32.totalorder %s20, 1
      %p85 = por %p83, %p84
      %p87 = scmp.ne.s32.totalorder %s72, %s86
      %p88 = scmp.eq.s32.totalorder %s20, 0
      %p89 = por %p87, %p88
      %s91 = sadd.s32 %s90, 1
      %p94 = scmp.eq.s32.totalorder %s14, 1
      %p95 = scmp.ne.s32.totalorder %s90, %s92
      %p96 = scmp.eq.s32.totalorder %s14, 0
      %p97 = por %p95, %p96
      %p98 = scmp.ne.s32.totalorder %s90, %s92
      %p99 = scmp.eq.s32.totalorder %s19, 1
      %p100 = por %p98, %p99
      %p101 = scmp.ne.s32.totalorder %s92, %s93
      %p102 = scmp.eq.s32.totalorder %s19, 0
      %p103 = por %p101, %p102
      %p104 = scmp.ne.s32.totalorder %s92, %s93
      %p105 = scmp.eq.s32.totalorder %s20, 1
      %p106 = por %p104, %p105
      %p108 = scmp.ne.s32.totalorder %s93, %s107
      %p109 = scmp.eq.s32.totalorder %s20, 0
      %p110 = por %p108, %p109
      %s112 = sadd.s32 %s111, 1
      %p115 = scmp.eq.s32.totalorder %s14, 1
      %p116 = scmp.ne.s32.totalorder %s111, %s113
      %p117 = scmp.eq.s32.totalorder %s14, 0
      %p118 = por %p116, %p117
      %p119 = scmp.ne.s32.totalorder %s111, %s113
      %p120 = scmp.eq.s32.totalorder %s19, 1
      %p121 = por %p119, %p120
      %p122 = scmp.ne.s32.totalorder %s113, %s114
      %p123 = scmp.eq.s32.totalorder %s19, 0
      %p124 = por %p122, %p123
      %p125 = scmp.ne.s32.totalorder %s113, %s114
      %p126 = scmp.eq.s32.totalorder %s20, 1
      %p127 = por %p125, %p126
      %p129 = scmp.ne.s32.totalorder %s114, %s128
      %p130 = scmp.eq.s32.totalorder %s20, 0
      %p131 = por %p129, %p130
      %s133 = sadd.s32 %s132, 1
      %p136 = scmp.eq.s32.totalorder %s14, 1
      %p137 = scmp.ne.s32.totalorder %s132, %s134
      %p138 = scmp.eq.s32.totalorder %s14, 0
      %p139 = por %p137, %p138
      %p140 = scmp.ne.s32.totalorder %s132, %s134
      %p141 = scmp.eq.s32.totalorder %s19, 1
      %p142 = por %p140, %p141
      %p143 = scmp.ne.s32.totalorder %s134, %s135
      %p144 = scmp.eq.s32.totalorder %s19, 0
      %p145 = por %p143, %p144
      %p146 = scmp.ne.s32.totalorder %s134, %s135
      %p147 = scmp.eq.s32.totalorder %s20, 1
      %p148 = por %p146, %p147
      %p150 = scmp.ne.s32.totalorder %s135, %s149
      %p151 = scmp.eq.s32.totalorder %s20, 0
      %p152 = por %p150, %p151
      %s154 = sadd.s32 %s153, 1
      %p157 = scmp.eq.s32.totalorder %s14, 1
      %p158 = scmp.ne.s32.totalorder %s153, %s155
      %p159 = scmp.eq.s32.totalorder %s14, 0
      %p160 = por %p158, %p159
      %p161 = scmp.ne.s32.totalorder %s153, %s155
      %p162 = scmp.eq.s32.totalorder %s19, 1
      %p163 = por %p161, %p162
      %p164 = scmp.ne.s32.totalorder %s155, %s156
      %p165 = scmp.eq.s32.totalorder %s19, 0
      %p166 = por %p164, %p165
      %p167 = scmp.ne.s32.totalorder %s155, %s156
      %p168 = scmp.eq.s32.totalorder %s20, 1
      %p169 = por %p167, %p168
      %p171 = scmp.ne.s32.totalorder %s156, %s170
      %p172 = scmp.eq.s32.totalorder %s20, 0
      %p173 = por %p171, %p172
      %s174 = ssub.s32 %s14, %s21
      %p175 = scmp.eq.s32.totalorder %s174, 0
      %s177 = sadd.s32 %s176, 1
      %s178 = scalar_select %p175, %s176, %s177
      %p181 = pneg %p175
      %p182 = scmp.eq.s32.totalorder %s14, 1
      %p183 = por %p181, %p182
      %p184 = scmp.ne.s32.totalorder %s176, %s179
      %p185 = scmp.eq.s32.totalorder %s14, 0
      %p186 = por %p184, %p185
      %p187 = scmp.ne.s32.totalorder %s176, %s179
      %p188 = scmp.eq.s32.totalorder %s19, 1
      %p189 = por %p187, %p188
      %p190 = scmp.ne.s32.totalorder %s179, %s180
      %p191 = scmp.eq.s32.totalorder %s19, 0
      %p192 = por %p190, %p191
      %p193 = scmp.ne.s32.totalorder %s179, %s180
      %p194 = scmp.eq.s32.totalorder %s20, 1
      %p195 = por %p193, %p194
      %p197 = scmp.ne.s32.totalorder %s180, %s196
      %p198 = scmp.eq.s32.totalorder %s20, 0
      %p199 = por %p197, %p198
      %p200 = scmp.le.s32.totalorder 1, %s14
      %p201 = scmp.lt.s32.totalorder %s14, 3
      %p202 = pnand %p200, %p201
      %p203 = pneg %p202
      // Predicated region
      $region9: #{tpu_custom_call.1} parent=5 // pred_check
        _
      $region10: #{tpu_custom_call.1} parent=5 // pred_check_branch
        %205 = sbr.rel (%p202) target = $region12
      $region11: #{tpu_custom_call.1} parent=5 // pred_region
        %s206 = ssub.s32 %s14, 1
        // Predicated region
        $region13: #{tpu_custom_call.1} parent=11 // pred_check
          %p207 = pneg %p61
        $region14: #{tpu_custom_call.1} parent=11 // pred_check_branch
          %209 = sbr.rel (%p207) target = $region16
        $region15: #{tpu_custom_call.1} parent=11 // pred_region
          %s211 = ssub.s32 11520, 11520
          %212 = vsyncadd [#allocation3], %s211
          %s213 = sshll.u32 [#allocation2], 4
          %s214 = int_to_ptr.vmem [resolvable:$true] %s213
          %219 = dma.hbm_to_vmem [thread:$0]  %s1, 11520, %s214, [#allocation3], 256, 256, 16
        $region16: #{tpu_custom_call.1} parent=11 // pred_fallthru
          _
        // Predicated region
        $region17: #{tpu_custom_call.1} parent=11 // pred_check
          %p220 = pneg %p82
        $region18: #{tpu_custom_call.1} parent=11 // pred_check_branch
          %222 = sbr.rel (%p220) target = $region20
        $region19: #{tpu_custom_call.1} parent=11 // pred_region
          _
        $region20: #{tpu_custom_call.1} parent=11 // pred_fallthru
          _
        // Predicated region
        $region21: #{tpu_custom_call.1} parent=11 // pred_check
          %p223 = pneg %p103
        $region22: #{tpu_custom_call.1} parent=11 // pred_check_branch
          %225 = sbr.rel (%p223) target = $region24
        $region23: #{tpu_custom_call.1} parent=11 // pred_region
          _
        $region24: #{tpu_custom_call.1} parent=11 // pred_fallthru
          _
        // Predicated region
        $region25: #{tpu_custom_call.1} parent=11 // pred_check
          %p226 = pneg %p124
        $region26: #{tpu_custom_call.1} parent=11 // pred_check_branch
          %228 = sbr.rel (%p226) target = $region28
        $region27: #{tpu_custom_call.1} parent=11 // pred_region
          _
        $region28: #{tpu_custom_call.1} parent=11 // pred_fallthru
          _
        // Predicated region
        $region29: #{tpu_custom_call.1} parent=11 // pred_check
          %p229 = pneg %p145
        $region30: #{tpu_custom_call.1} parent=11 // pred_check_branch
          %231 = sbr.rel (%p229) target = $region32
        $region31: #{tpu_custom_call.1} parent=11 // pred_region
          _
        $region32: #{tpu_custom_call.1} parent=11 // pred_fallthru
          _
        // Predicated region
        $region33: #{tpu_custom_call.1} parent=11 // pred_check
          %p232 = pneg %p166
        $region34: #{tpu_custom_call.1} parent=11 // pred_check_branch
          %234 = sbr.rel (%p232) target = $region36
        $region35: #{tpu_custom_call.1} parent=11 // pred_region
          _
        $region36: #{tpu_custom_call.1} parent=11 // pred_fallthru
          _
      $region12: #{tpu_custom_call.1} parent=5 // pred_fallthru
        _
      %p235 = scmp.lt.s32.totalorder %s14, 2
      // Predicated region
      $region37: #{tpu_custom_call.1} parent=5 // pred_check
        %p236 = pneg %p235
      $region38: #{tpu_custom_call.1} parent=5 // pred_check_branch
        %238 = sbr.rel (%p236) target = $region40
      $region39: #{tpu_custom_call.1} parent=5 // pred_region
        // Predicated region
        $region41: #{tpu_custom_call.1} parent=39 // pred_check
          %p239 = pneg %p34
        $region42: #{tpu_custom_call.1} parent=39 // pred_check_branch
          %241 = sbr.rel (%p239) target = $region44
        $region43: #{tpu_custom_call.1} parent=39 // pred_region
          %p242 = scmp.lt.s32.totalorder %s14, 1
          %s243 = scalar_select %p242, %s14, 1
          %s244 = smul.addr %s243, 10
          %s245 = smul.addr %s244, 8
          %s246 = scalar_lea.vmem %s0, %s245
        $region44: #{tpu_custom_call.1} parent=39 // pred_fallthru
          _
      $region40: #{tpu_custom_call.1} parent=5 // pred_fallthru
        _
      %p247 = scmp.le.s32.totalorder 1, %s14
      %p248 = scmp.lt.s32.totalorder %s14, 3
      %p249 = pnand %p247, %p248
      %p250 = pneg %p249
      // Predicated region
      $region45: #{tpu_custom_call.1} parent=5 // pred_check
        _
      $region46: #{tpu_custom_call.1} parent=5 // pred_check_branch
        %252 = sbr.rel (%p249) target = $region48
      $region47: #{tpu_custom_call.1} parent=5 // pred_region
        %s253 = ssub.s32 %s14, 1
        // Predicated region
        $region49: #{tpu_custom_call.1} parent=47 // pred_check
          %p254 = pneg %p61
        $region50: #{tpu_custom_call.1} parent=47 // pred_check_branch
          %256 = sbr.rel (%p254) target = $region52
        $region51: #{tpu_custom_call.1} parent=47 // pred_region
          %257 = dma.done [#allocation3], 11520
        $region52: #{tpu_custom_call.1} parent=47 // pred_fallthru
          _
        %p258 = scmp.lt.s32.totalorder %s19, 1
        %s259 = scalar_select %p258, %s19, 1
        %s260 = smul.addr %s259, 10
        %s261 = smul.addr %s260, 8
        %s262 = scalar_lea.vmem %s0, %s261
        %p263 = pneg %p40
        %p264 = pneg %p37
        %p265 = pneg %p61
        %p266 = pneg %p58
        %p267 = pneg %p82
        %p268 = pneg %p79
        %p269 = pneg %p103
        %p270 = pneg %p100
        %p271 = pneg %p124
        %p272 = pneg %p121
        %p273 = pneg %p145
        %p274 = pneg %p142
        %p275 = pneg %p166
        %p276 = pneg %p163
        %p277 = pneg %p192
        %p278 = pneg %p189
        %p279 = scmp.lt.s32.totalorder %s19, 1
        %s280 = scalar_select %p279, %s19, 1
        %s281 = smul.addr %s280, 2
        %s282 = smul.addr %s281, 8
        %s283 = scalar_lea.vmem %s7, %s282
        %p284 = scmp.lt.s32.totalorder %s19, 1
        %s285 = scalar_select %p284, %s19, 1
        %s286 = smul.addr %s285, 10
        %s287 = smul.addr %s286, 8
        %s288 = scalar_lea.vmem %s0, %s287
        %p289 = scmp.lt.s32.totalorder %s19, 1
        %s290 = scalar_select %p289, %s19, 1
        %s291 = smul.addr %s290, 2
        %s292 = smul.addr %s291, 8
        %s293 = scalar_lea.vmem %s7, %s292
        %v294 = vld [vmem:[%s288] sm:$0xff]
        %v295 = vld [vmem:[%s288 + $0x8] sm:$0xff]
        %v296 = vld [vmem:[%s288 + $0x10] sm:$0xff]
        %v297 = vld [vmem:[%s288 + $0x18] sm:$0xff]
        %v298 = vld [vmem:[%s288 + $0x20] sm:$0xff]
        %v299 = vld [vmem:[%s288 + $0x28] sm:$0xff]
        %v300 = vld [vmem:[%s288 + $0x30] sm:$0xff]
        %v301 = vld [vmem:[%s288 + $0x38] sm:$0xff]
        %v302 = vld [vmem:[%s288 + $0x40] sm:$0xff]
        %v303 = vld [vmem:[%s288 + $0x48] sm:$0xff]
        %s304 = scalar_lea.vmem [#allocation2], 320
        %v305 = vld [vmem:[%s304] sm:$0xff]
        %v306 = vld [vmem:[%s304 + $0x8] sm:$0xff]
        %v307 = vld [vmem:[%s304 + $0x10] sm:$0xff]
        %v308 = vld [vmem:[%s304 + $0x18] sm:$0xff]
        %v309 = vld [vmem:[%s304 + $0x20] sm:$0xff]
        %v310 = vld [vmem:[%s304 + $0x28] sm:$0xff]
        %v311 = vld [vmem:[%s304 + $0x30] sm:$0xff]
        %v312 = vld [vmem:[%s304 + $0x38] sm:$0xff]
        %v313 = vld [vmem:[%s304 + $0x40] sm:$0xff]
        %v314 = vld [vmem:[%s304 + $0x48] sm:$0xff]
        %v315 = vmul.f32 %v294, %v305
        %v316 = vmul.f32 %v295, %v306
        %v317 = vmul.f32 %v296, %v307
        %v318 = vmul.f32 %v297, %v308
        %v319 = vmul.f32 %v298, %v309
        %v320 = vmul.f32 %v299, %v310
        %v321 = vmul.f32 %v300, %v311
        %v322 = vmul.f32 %v301, %v312
        %v323 = vmul.f32 %v302, %v313
        %v324 = vmul.f32 %v303, %v314
        %325 = vrot.lane.b32.xlu0 %v294, 17
        %v326 = vpop.permute.xlu0 %325
        %327 = vrot.lane.b32.xlu0 %v296, 17
        %v328 = vpop.permute.xlu0 %327
        %329 = vrot.lane.b32.xlu0 %v298, 17
        %v330 = vpop.permute.xlu0 %329
        %331 = vrot.lane.b32.xlu0 %v300, 17
        %v332 = vpop.permute.xlu0 %331
        %333 = vrot.lane.b32.xlu0 %v302, 17
        %v334 = vpop.permute.xlu0 %333
        %335 = vrot.lane.b32.xlu0 %v295, 17
        %v336 = vpop.permute.xlu0 %335
        %337 = vrot.lane.b32.xlu0 %v297, 17
        %v338 = vpop.permute.xlu0 %337
        %339 = vrot.lane.b32.xlu0 %v299, 17
        %v340 = vpop.permute.xlu0 %339
        %341 = vrot.lane.b32.xlu0 %v301, 17
        %v342 = vpop.permute.xlu0 %341
        %343 = vrot.lane.b32.xlu0 %v303, 17
        %v344 = vpop.permute.xlu0 %343
        %v345 = vlaneseq
        %v346 = vand.u32 %v345, 127
        %vm347 = vcmp.lt.s32.totalorder %v346, 17
        %v348 = vsel %vm347, %v326, %v336
        %v349 = vsel %vm347, %v328, %v338
        %v350 = vsel %vm347, %v330, %v340
        %v351 = vsel %vm347, %v332, %v342
        %v352 = vsel %vm347, %v334, %v344
        %v353 = vsel %vm347, %v336, %v326
        %v354 = vsel %vm347, %v338, %v328
        %v355 = vsel %vm347, %v340, %v330
        %v356 = vsel %vm347, %v342, %v332
        %v357 = vsel %vm347, %v344, %v334
        %v358 = vld [vmem:[#allocation2] sm:$0xff]
        %v359 = vld [vmem:[#allocation2 + $0x8] sm:$0xff]
        %v360 = vld [vmem:[#allocation2 + $0x10] sm:$0xff]
        %v361 = vld [vmem:[#allocation2 + $0x18] sm:$0xff]
        %v362 = vld [vmem:[#allocation2 + $0x20] sm:$0xff]
        %v363 = vld [vmem:[#allocation2 + $0x28] sm:$0xff]
        %v364 = vld [vmem:[#allocation2 + $0x30] sm:$0xff]
        %v365 = vld [vmem:[#allocation2 + $0x38] sm:$0xff]
        %v366 = vld [vmem:[#allocation2 + $0x40] sm:$0xff]
        %v367 = vld [vmem:[#allocation2 + $0x48] sm:$0xff]
        %v368 = vmul.f32 %v353, %v358
        %v369 = vmul.f32 %v348, %v359
        %v370 = vmul.f32 %v354, %v360
        %v371 = vmul.f32 %v349, %v361
        %v372 = vmul.f32 %v355, %v362
        %v373 = vmul.f32 %v350, %v363
        %v374 = vmul.f32 %v356, %v364
        %v375 = vmul.f32 %v351, %v365
        %v376 = vmul.f32 %v357, %v366
        %v377 = vmul.f32 %v352, %v367
        %v378 = vadd.f32 %v315, %v368
        %v379 = vadd.f32 %v316, %v369
        %v380 = vadd.f32 %v317, %v370
        %v381 = vadd.f32 %v318, %v371
        %v382 = vadd.f32 %v319, %v372
        %v383 = vadd.f32 %v320, %v373
        %v384 = vadd.f32 %v321, %v374
        %v385 = vadd.f32 %v322, %v375
        %v386 = vadd.f32 %v323, %v376
        %v387 = vadd.f32 %v324, %v377
        %388 = vrot.lane.b32.xlu0 %v294, 16
        %v389 = vpop.permute.xlu0 %388
        %390 = vrot.lane.b32.xlu0 %v296, 16
        %v391 = vpop.permute.xlu0 %390
        %392 = vrot.lane.b32.xlu0 %v298, 16
        %v393 = vpop.permute.xlu0 %392
        %394 = vrot.lane.b32.xlu0 %v300, 16
        %v395 = vpop.permute.xlu0 %394
        %396 = vrot.lane.b32.xlu0 %v302, 16
        %v397 = vpop.permute.xlu0 %396
        %398 = vrot.lane.b32.xlu0 %v295, 16
        %v399 = vpop.permute.xlu0 %398
        %400 = vrot.lane.b32.xlu0 %v297, 16
        %v401 = vpop.permute.xlu0 %400
        %402 = vrot.lane.b32.xlu0 %v299, 16
        %v403 = vpop.permute.xlu0 %402
        %404 = vrot.lane.b32.xlu0 %v301, 16
        %v405 = vpop.permute.xlu0 %404
        %406 = vrot.lane.b32.xlu0 %v303, 16
        %v407 = vpop.permute.xlu0 %406
        %vm408 = vcmp.lt.s32.totalorder %v346, 16
        %v409 = vsel %vm408, %v389, %v399
        %v410 = vsel %vm408, %v391, %v401
        %v411 = vsel %vm408, %v393, %v403
        %v412 = vsel %vm408, %v395, %v405
        %v413 = vsel %vm408, %v397, %v407
        %v414 = vsel %vm408, %v399, %v389
        %v415 = vsel %vm408, %v401, %v391
        %v416 = vsel %vm408, %v403, %v393
        %v417 = vsel %vm408, %v405, %v395
        %v418 = vsel %vm408, %v407, %v397
        %s419 = scalar_lea.vmem [#allocation2], 80
        %v420 = vld [vmem:[%s419] sm:$0xff]
        %v421 = vld [vmem:[%s419 + $0x8] sm:$0xff]
        %v422 = vld [vmem:[%s419 + $0x10] sm:$0xff]
        %v423 = vld [vmem:[%s419 + $0x18] sm:$0xff]
        %v424 = vld [vmem:[%s419 + $0x20] sm:$0xff]
        %v425 = vld [vmem:[%s419 + $0x28] sm:$0xff]
        %v426 = vld [vmem:[%s419 + $0x30] sm:$0xff]
        %v427 = vld [vmem:[%s419 + $0x38] sm:$0xff]
        %v428 = vld [vmem:[%s419 + $0x40] sm:$0xff]
        %v429 = vld [vmem:[%s419 + $0x48] sm:$0xff]
        %v430 = vmul.f32 %v414, %v420
        %v431 = vmul.f32 %v409, %v421
        %v432 = vmul.f32 %v415, %v422
        %v433 = vmul.f32 %v410, %v423
        %v434 = vmul.f32 %v416, %v424
        %v435 = vmul.f32 %v411, %v425
        %v436 = vmul.f32 %v417, %v426
        %v437 = vmul.f32 %v412, %v427
        %v438 = vmul.f32 %v418, %v428
        %v439 = vmul.f32 %v413, %v429
        %v440 = vadd.f32 %v378, %v430
        %v441 = vadd.f32 %v379, %v431
        %v442 = vadd.f32 %v380, %v432
        %v443 = vadd.f32 %v381, %v433
        %v444 = vadd.f32 %v382, %v434
        %v445 = vadd.f32 %v383, %v435
        %v446 = vadd.f32 %v384, %v436
        %v447 = vadd.f32 %v385, %v437
        %v448 = vadd.f32 %v386, %v438
        %v449 = vadd.f32 %v387, %v439
        %450 = vrot.lane.b32.xlu0 %v294, 15
        %v451 = vpop.permute.xlu0 %450
        %452 = vrot.lane.b32.xlu0 %v296, 15
        %v453 = vpop.permute.xlu0 %452
        %454 = vrot.lane.b32.xlu0 %v298, 15
        %v455 = vpop.permute.xlu0 %454
        %456 = vrot.lane.b32.xlu0 %v300, 15
        %v457 = vpop.permute.xlu0 %456
        %458 = vrot.lane.b32.xlu0 %v302, 15
        %v459 = vpop.permute.xlu0 %458
        %460 = vrot.lane.b32.xlu0 %v295, 15
        %v461 = vpop.permute.xlu0 %460
        %462 = vrot.lane.b32.xlu0 %v297, 15
        %v463 = vpop.permute.xlu0 %462
        %464 = vrot.lane.b32.xlu0 %v299, 15
        %v465 = vpop.permute.xlu0 %464
        %466 = vrot.lane.b32.xlu0 %v301, 15
        %v467 = vpop.permute.xlu0 %466
        %468 = vrot.lane.b32.xlu0 %v303, 15
        %v469 = vpop.permute.xlu0 %468
        %vm470 = vcmp.lt.s32.totalorder %v346, 15
        %v471 = vsel %vm470, %v451, %v461
        %v472 = vsel %vm470, %v453, %v463
        %v473 = vsel %vm470, %v455, %v465
        %v474 = vsel %vm470, %v457, %v467
        %v475 = vsel %vm470, %v459, %v469
        %v476 = vsel %vm470, %v461, %v451
        %v477 = vsel %vm470, %v463, %v453
        %v478 = vsel %vm470, %v465, %v455
        %v479 = vsel %vm470, %v467, %v457
        %v480 = vsel %vm470, %v469, %v459
        %s481 = scalar_lea.vmem [#allocation2], 160
        %v482 = vld [vmem:[%s481] sm:$0xff]
        %v483 = vld [vmem:[%s481 + $0x8] sm:$0xff]
        %v484 = vld [vmem:[%s481 + $0x10] sm:$0xff]
        %v485 = vld [vmem:[%s481 + $0x18] sm:$0xff]
        %v486 = vld [vmem:[%s481 + $0x20] sm:$0xff]
        %v487 = vld [vmem:[%s481 + $0x28] sm:$0xff]
        %v488 = vld [vmem:[%s481 + $0x30] sm:$0xff]
        %v489 = vld [vmem:[%s481 + $0x38] sm:$0xff]
        %v490 = vld [vmem:[%s481 + $0x40] sm:$0xff]
        %v491 = vld [vmem:[%s481 + $0x48] sm:$0xff]
        %v492 = vmul.f32 %v476, %v482
        %v493 = vmul.f32 %v471, %v483
        %v494 = vmul.f32 %v477, %v484
        %v495 = vmul.f32 %v472, %v485
        %v496 = vmul.f32 %v478, %v486
        %v497 = vmul.f32 %v473, %v487
        %v498 = vmul.f32 %v479, %v488
        %v499 = vmul.f32 %v474, %v489
        %v500 = vmul.f32 %v480, %v490
        %v501 = vmul.f32 %v475, %v491
        %v502 = vadd.f32 %v440, %v492
        %v503 = vadd.f32 %v441, %v493
        %v504 = vadd.f32 %v442, %v494
        %v505 = vadd.f32 %v443, %v495
        %v506 = vadd.f32 %v444, %v496
        %v507 = vadd.f32 %v445, %v497
        %v508 = vadd.f32 %v446, %v498
        %v509 = vadd.f32 %v447, %v499
        %v510 = vadd.f32 %v448, %v500
        %v511 = vadd.f32 %v449, %v501
        %512 = vrot.lane.b32.xlu0 %v294, 1
        %v513 = vpop.permute.xlu0 %512
        %514 = vrot.lane.b32.xlu0 %v296, 1
        %v515 = vpop.permute.xlu0 %514
        %516 = vrot.lane.b32.xlu0 %v298, 1
        %v517 = vpop.permute.xlu0 %516
        %518 = vrot.lane.b32.xlu0 %v300, 1
        %v519 = vpop.permute.xlu0 %518
        %520 = vrot.lane.b32.xlu0 %v302, 1
        %v521 = vpop.permute.xlu0 %520
        %522 = vrot.lane.b32.xlu0 %v295, 1
        %v523 = vpop.permute.xlu0 %522
        %524 = vrot.lane.b32.xlu0 %v297, 1
        %v525 = vpop.permute.xlu0 %524
        %526 = vrot.lane.b32.xlu0 %v299, 1
        %v527 = vpop.permute.xlu0 %526
        %528 = vrot.lane.b32.xlu0 %v301, 1
        %v529 = vpop.permute.xlu0 %528
        %530 = vrot.lane.b32.xlu0 %v303, 1
        %v531 = vpop.permute.xlu0 %530
        %vm532 = vcmp.lt.s32.totalorder %v346, 1
        %v533 = vsel %vm532, %v513, %v523
        %v534 = vsel %vm532, %v515, %v525
        %v535 = vsel %vm532, %v517, %v527
        %v536 = vsel %vm532, %v519, %v529
        %v537 = vsel %vm532, %v521, %v531
        %v538 = vsel %vm532, %v523, %v513
        %v539 = vsel %vm532, %v525, %v515
        %v540 = vsel %vm532, %v527, %v517
        %v541 = vsel %vm532, %v529, %v519
        %v542 = vsel %vm532, %v531, %v521
        %s543 = scalar_lea.vmem [#allocation2], 240
        %v544 = vld [vmem:[%s543] sm:$0xff]
        %v545 = vld [vmem:[%s543 + $0x8] sm:$0xff]
        %v546 = vld [vmem:[%s543 + $0x10] sm:$0xff]
        %v547 = vld [vmem:[%s543 + $0x18] sm:$0xff]
        %v548 = vld [vmem:[%s543 + $0x20] sm:$0xff]
        %v549 = vld [vmem:[%s543 + $0x28] sm:$0xff]
        %v550 = vld [vmem:[%s543 + $0x30] sm:$0xff]
        %v551 = vld [vmem:[%s543 + $0x38] sm:$0xff]
        %v552 = vld [vmem:[%s543 + $0x40] sm:$0xff]
        %v553 = vld [vmem:[%s543 + $0x48] sm:$0xff]
        %v554 = vmul.f32 %v538, %v544
        %v555 = vmul.f32 %v533, %v545
        %v556 = vmul.f32 %v539, %v546
        %v557 = vmul.f32 %v534, %v547
        %v558 = vmul.f32 %v540, %v548
        %v559 = vmul.f32 %v535, %v549
        %v560 = vmul.f32 %v541, %v550
        %v561 = vmul.f32 %v536, %v551
        %v562 = vmul.f32 %v542, %v552
        %v563 = vmul.f32 %v537, %v553
        %v564 = vadd.f32 %v502, %v554
        %v565 = vadd.f32 %v503, %v555
        %v566 = vadd.f32 %v504, %v556
        %v567 = vadd.f32 %v505, %v557
        %v568 = vadd.f32 %v506, %v558
        %v569 = vadd.f32 %v507, %v559
        %v570 = vadd.f32 %v508, %v560
        %v571 = vadd.f32 %v509, %v561
        %v572 = vadd.f32 %v510, %v562
        %v573 = vadd.f32 %v511, %v563
        %574 = vrot.lane.b32.xlu0 %v294, 127
        %v575 = vpop.permute.xlu0 %574
        %576 = vrot.lane.b32.xlu0 %v296, 127
        %v577 = vpop.permute.xlu0 %576
        %578 = vrot.lane.b32.xlu0 %v298, 127
        %v579 = vpop.permute.xlu0 %578
        %580 = vrot.lane.b32.xlu0 %v300, 127
        %v581 = vpop.permute.xlu0 %580
        %582 = vrot.lane.b32.xlu0 %v302, 127
        %v583 = vpop.permute.xlu0 %582
        %584 = vrot.lane.b32.xlu0 %v295, 127
        %v585 = vpop.permute.xlu0 %584
        %586 = vrot.lane.b32.xlu0 %v297, 127
        %v587 = vpop.permute.xlu0 %586
        %588 = vrot.lane.b32.xlu0 %v299, 127
        %v589 = vpop.permute.xlu0 %588
        %590 = vrot.lane.b32.xlu0 %v301, 127
        %v591 = vpop.permute.xlu0 %590
        %592 = vrot.lane.b32.xlu0 %v303, 127
        %v593 = vpop.permute.xlu0 %592
        %vm594 = vcmp.lt.s32.totalorder %v346, 127
        %v595 = vsel %vm594, %v575, %v585
        %v596 = vsel %vm594, %v577, %v587
        %v597 = vsel %vm594, %v579, %v589
        %v598 = vsel %vm594, %v581, %v591
        %v599 = vsel %vm594, %v583, %v593
        %v600 = vsel %vm594, %v585, %v575
        %v601 = vsel %vm594, %v587, %v577
        %v602 = vsel %vm594, %v589, %v579
        %v603 = vsel %vm594, %v591, %v581
        %v604 = vsel %vm594, %v593, %v583
        %s605 = scalar_lea.vmem [#allocation2], 400
        %v606 = vld [vmem:[%s605] sm:$0xff]
        %v607 = vld [vmem:[%s605 + $0x8] sm:$0xff]
        %v608 = vld [vmem:[%s605 + $0x10] sm:$0xff]
        %v609 = vld [vmem:[%s605 + $0x18] sm:$0xff]
        %v610 = vld [vmem:[%s605 + $0x20] sm:$0xff]
        %v611 = vld [vmem:[%s605 + $0x28] sm:$0xff]
        %v612 = vld [vmem:[%s605 + $0x30] sm:$0xff]
        %v613 = vld [vmem:[%s605 + $0x38] sm:$0xff]
        %v614 = vld [vmem:[%s605 + $0x40] sm:$0xff]
        %v615 = vld [vmem:[%s605 + $0x48] sm:$0xff]
        %v616 = vmul.f32 %v595, %v606
        %v617 = vmul.f32 %v600, %v607
        %v618 = vmul.f32 %v596, %v608
        %v619 = vmul.f32 %v601, %v609
        %v620 = vmul.f32 %v597, %v610
        %v621 = vmul.f32 %v602, %v611
        %v622 = vmul.f32 %v598, %v612
        %v623 = vmul.f32 %v603, %v613
        %v624 = vmul.f32 %v599, %v614
        %v625 = vmul.f32 %v604, %v615
        %v626 = vadd.f32 %v564, %v616
        %v627 = vadd.f32 %v565, %v617
        %v628 = vadd.f32 %v566, %v618
        %v629 = vadd.f32 %v567, %v619
        %v630 = vadd.f32 %v568, %v620
        %v631 = vadd.f32 %v569, %v621
        %v632 = vadd.f32 %v570, %v622
        %v633 = vadd.f32 %v571, %v623
        %v634 = vadd.f32 %v572, %v624
        %v635 = vadd.f32 %v573, %v625
        %636 = vrot.lane.b32.xlu0 %v294, 113
        %v637 = vpop.permute.xlu0 %636
        %638 = vrot.lane.b32.xlu0 %v296, 113
        %v639 = vpop.permute.xlu0 %638
        %640 = vrot.lane.b32.xlu0 %v298, 113
        %v641 = vpop.permute.xlu0 %640
        %642 = vrot.lane.b32.xlu0 %v300, 113
        %v643 = vpop.permute.xlu0 %642
        %644 = vrot.lane.b32.xlu0 %v302, 113
        %v645 = vpop.permute.xlu0 %644
        %646 = vrot.lane.b32.xlu0 %v295, 113
        %v647 = vpop.permute.xlu0 %646
        %648 = vrot.lane.b32.xlu0 %v297, 113
        %v649 = vpop.permute.xlu0 %648
        %650 = vrot.lane.b32.xlu0 %v299, 113
        %v651 = vpop.permute.xlu0 %650
        %652 = vrot.lane.b32.xlu0 %v301, 113
        %v653 = vpop.permute.xlu0 %652
        %654 = vrot.lane.b32.xlu0 %v303, 113
        %v655 = vpop.permute.xlu0 %654
        %vm656 = vcmp.lt.s32.totalorder %v346, 113
        %v657 = vsel %vm656, %v637, %v647
        %v658 = vsel %vm656, %v639, %v649
        %v659 = vsel %vm656, %v641, %v651
        %v660 = vsel %vm656, %v643, %v653
        %v661 = vsel %vm656, %v645, %v655
        %v662 = vsel %vm656, %v647, %v637
        %v663 = vsel %vm656, %v649, %v639
        %v664 = vsel %vm656, %v651, %v641
        %v665 = vsel %vm656, %v653, %v643
        %v666 = vsel %vm656, %v655, %v645
        %s667 = scalar_lea.vmem [#allocation2], 480
        %v668 = vld [vmem:[%s667] sm:$0xff]
        %v669 = vld [vmem:[%s667 + $0x8] sm:$0xff]
        %v670 = vld [vmem:[%s667 + $0x10] sm:$0xff]
        %v671 = vld [vmem:[%s667 + $0x18] sm:$0xff]
        %v672 = vld [vmem:[%s667 + $0x20] sm:$0xff]
        %v673 = vld [vmem:[%s667 + $0x28] sm:$0xff]
        %v674 = vld [vmem:[%s667 + $0x30] sm:$0xff]
        %v675 = vld [vmem:[%s667 + $0x38] sm:$0xff]
        %v676 = vld [vmem:[%s667 + $0x40] sm:$0xff]
        %v677 = vld [vmem:[%s667 + $0x48] sm:$0xff]
        %v678 = vmul.f32 %v657, %v668
        %v679 = vmul.f32 %v662, %v669
        %v680 = vmul.f32 %v658, %v670
        %v681 = vmul.f32 %v663, %v671
        %v682 = vmul.f32 %v659, %v672
        %v683 = vmul.f32 %v664, %v673
        %v684 = vmul.f32 %v660, %v674
        %v685 = vmul.f32 %v665, %v675
        %v686 = vmul.f32 %v661, %v676
        %v687 = vmul.f32 %v666, %v677
        %v688 = vadd.f32 %v626, %v678
        %v689 = vadd.f32 %v627, %v679
        %v690 = vadd.f32 %v628, %v680
        %v691 = vadd.f32 %v629, %v681
        %v692 = vadd.f32 %v630, %v682
        %v693 = vadd.f32 %v631, %v683
        %v694 = vadd.f32 %v632, %v684
        %v695 = vadd.f32 %v633, %v685
        %v696 = vadd.f32 %v634, %v686
        %v697 = vadd.f32 %v635, %v687
        %698 = vrot.lane.b32.xlu0 %v294, 112
        %v699 = vpop.permute.xlu0 %698
        %700 = vrot.lane.b32.xlu0 %v296, 112
        %v701 = vpop.permute.xlu0 %700
        %702 = vrot.lane.b32.xlu0 %v298, 112
        %v703 = vpop.permute.xlu0 %702
        %704 = vrot.lane.b32.xlu0 %v300, 112
        %v705 = vpop.permute.xlu0 %704
        %706 = vrot.lane.b32.xlu0 %v302, 112
        %v707 = vpop.permute.xlu0 %706
        %708 = vrot.lane.b32.xlu0 %v295, 112
        %v709 = vpop.permute.xlu0 %708
        %710 = vrot.lane.b32.xlu0 %v297, 112
        %v711 = vpop.permute.xlu0 %710
        %712 = vrot.lane.b32.xlu0 %v299, 112
        %v713 = vpop.permute.xlu0 %712
        %714 = vrot.lane.b32.xlu0 %v301, 112
        %v715 = vpop.permute.xlu0 %714
        %716 = vrot.lane.b32.xlu0 %v303, 112
        %v717 = vpop.permute.xlu0 %716
        %vm718 = vcmp.lt.s32.totalorder %v346, 112
        %v719 = vsel %vm718, %v699, %v709
        %v720 = vsel %vm718, %v701, %v711
        %v721 = vsel %vm718, %v703, %v713
        %v722 = vsel %vm718, %v705, %v715
        %v723 = vsel %vm718, %v707, %v717
        %v724 = vsel %vm718, %v709, %v699
        %v725 = vsel %vm718, %v711, %v701
        %v726 = vsel %vm718, %v713, %v703
        %v727 = vsel %vm718, %v715, %v705
        %v728 = vsel %vm718, %v717, %v707
        %s729 = scalar_lea.vmem [#allocation2], 560
        %v730 = vld [vmem:[%s729] sm:$0xff]
        %v731 = vld [vmem:[%s729 + $0x8] sm:$0xff]
        %v732 = vld [vmem:[%s729 + $0x10] sm:$0xff]
        %v733 = vld [vmem:[%s729 + $0x18] sm:$0xff]
        %v734 = vld [vmem:[%s729 + $0x20] sm:$0xff]
        %v735 = vld [vmem:[%s729 + $0x28] sm:$0xff]
        %v736 = vld [vmem:[%s729 + $0x30] sm:$0xff]
        %v737 = vld [vmem:[%s729 + $0x38] sm:$0xff]
        %v738 = vld [vmem:[%s729 + $0x40] sm:$0xff]
        %v739 = vld [vmem:[%s729 + $0x48] sm:$0xff]
        %v740 = vmul.f32 %v719, %v730
        %v741 = vmul.f32 %v724, %v731
        %v742 = vmul.f32 %v720, %v732
        %v743 = vmul.f32 %v725, %v733
        %v744 = vmul.f32 %v721, %v734
        %v745 = vmul.f32 %v726, %v735
        %v746 = vmul.f32 %v722, %v736
        %v747 = vmul.f32 %v727, %v737
        %v748 = vmul.f32 %v723, %v738
        %v749 = vmul.f32 %v728, %v739
        %v750 = vadd.f32 %v688, %v740
        %v751 = vadd.f32 %v689, %v741
        %v752 = vadd.f32 %v690, %v742
        %v753 = vadd.f32 %v691, %v743
        %v754 = vadd.f32 %v692, %v744
        %v755 = vadd.f32 %v693, %v745
        %v756 = vadd.f32 %v694, %v746
        %v757 = vadd.f32 %v695, %v747
        %v758 = vadd.f32 %v696, %v748
        %v759 = vadd.f32 %v697, %v749
        %760 = vrot.lane.b32.xlu0 %v294, 111
        %v761 = vpop.permute.xlu0 %760
        %762 = vrot.lane.b32.xlu0 %v296, 111
        %v763 = vpop.permute.xlu0 %762
        %764 = vrot.lane.b32.xlu0 %v298, 111
        %v765 = vpop.permute.xlu0 %764
        %766 = vrot.lane.b32.xlu0 %v300, 111
        %v767 = vpop.permute.xlu0 %766
        %768 = vrot.lane.b32.xlu0 %v302, 111
        %v769 = vpop.permute.xlu0 %768
        %770 = vrot.lane.b32.xlu0 %v295, 111
        %v771 = vpop.permute.xlu0 %770
        %772 = vrot.lane.b32.xlu0 %v297, 111
        %v773 = vpop.permute.xlu0 %772
        %774 = vrot.lane.b32.xlu0 %v299, 111
        %v775 = vpop.permute.xlu0 %774
        %776 = vrot.lane.b32.xlu0 %v301, 111
        %v777 = vpop.permute.xlu0 %776
        %778 = vrot.lane.b32.xlu0 %v303, 111
        %v779 = vpop.permute.xlu0 %778
        %vm780 = vcmp.lt.s32.totalorder %v346, 111
        %v781 = vsel %vm780, %v761, %v771
        %v782 = vsel %vm780, %v763, %v773
        %v783 = vsel %vm780, %v765, %v775
        %v784 = vsel %vm780, %v767, %v777
        %v785 = vsel %vm780, %v769, %v779
        %v786 = vsel %vm780, %v771, %v761
        %v787 = vsel %vm780, %v773, %v763
        %v788 = vsel %vm780, %v775, %v765
        %v789 = vsel %vm780, %v777, %v767
        %v790 = vsel %vm780, %v779, %v769
        %s791 = scalar_lea.vmem [#allocation2], 640
        %v792 = vld [vmem:[%s791] sm:$0xff]
        %v793 = vld [vmem:[%s791 + $0x8] sm:$0xff]
        %v794 = vld [vmem:[%s791 + $0x10] sm:$0xff]
        %v795 = vld [vmem:[%s791 + $0x18] sm:$0xff]
        %v796 = vld [vmem:[%s791 + $0x20] sm:$0xff]
        %v797 = vld [vmem:[%s791 + $0x28] sm:$0xff]
        %v798 = vld [vmem:[%s791 + $0x30] sm:$0xff]
        %v799 = vld [vmem:[%s791 + $0x38] sm:$0xff]
        %v800 = vld [vmem:[%s791 + $0x40] sm:$0xff]
        %v801 = vld [vmem:[%s791 + $0x48] sm:$0xff]
        %v802 = vmul.f32 %v781, %v792
        %v803 = vmul.f32 %v786, %v793
        %v804 = vmul.f32 %v782, %v794
        %v805 = vmul.f32 %v787, %v795
        %v806 = vmul.f32 %v783, %v796
        %v807 = vmul.f32 %v788, %v797
        %v808 = vmul.f32 %v784, %v798
        %v809 = vmul.f32 %v789, %v799
        %v810 = vmul.f32 %v785, %v800
        %v811 = vmul.f32 %v790, %v801
        %v812 = vadd.f32 %v750, %v802
        %v813 = vadd.f32 %v751, %v803
        %v814 = vadd.f32 %v752, %v804
        %v815 = vadd.f32 %v753, %v805
        %v816 = vadd.f32 %v754, %v806
        %v817 = vadd.f32 %v755, %v807
        %v818 = vadd.f32 %v756, %v808
        %v819 = vadd.f32 %v757, %v809
        %v820 = vadd.f32 %v758, %v810
        %v821 = vadd.f32 %v759, %v811
        %v822 = vld [vmem:[%s2] sm:$0xff]
        %v823 = vld [vmem:[%s2 + $0x8] sm:$0xff]
        %v824 = vld [vmem:[%s2 + $0x10] sm:$0xff]
        %v825 = vld [vmem:[%s2 + $0x18] sm:$0xff]
        %v826 = vld [vmem:[%s2 + $0x20] sm:$0xff]
        %828 = vset.pattern.permute.xlu0 0
        %829 = vperm.xlu0 %828, %v822
        %v830 = vpop.permute.xlu0 %829
        %833 = vset.pattern.permute.xlu0 0
        %834 = vperm.xlu0 %833, %v823
        %v835 = vpop.permute.xlu0 %834
        %838 = vset.pattern.permute.xlu0 0
        %839 = vperm.xlu0 %838, %v824
        %v840 = vpop.permute.xlu0 %839
        %843 = vset.pattern.permute.xlu0 0
        %844 = vperm.xlu0 %843, %v825
        %v845 = vpop.permute.xlu0 %844
        %848 = vset.pattern.permute.xlu0 0
        %849 = vperm.xlu0 %848, %v826
        %v850 = vpop.permute.xlu0 %849
        %v852 = vadd.f32 %v812, %v830
        %v853 = vadd.f32 %v813, %v830
        %v854 = vadd.f32 %v814, %v835
        %v855 = vadd.f32 %v815, %v835
        %v856 = vadd.f32 %v816, %v840
        %v857 = vadd.f32 %v817, %v840
        %v858 = vadd.f32 %v818, %v845
        %v859 = vadd.f32 %v819, %v845
        %v860 = vadd.f32 %v820, %v850
        %v861 = vadd.f32 %v821, %v850
        %v862 = vmax.f32 %v852, 0.0
        %v863 = vmax.f32 %v853, 0.0
        %v864 = vmax.f32 %v854, 0.0
        %v865 = vmax.f32 %v855, 0.0
        %v866 = vmax.f32 %v856, 0.0
        %v867 = vmax.f32 %v857, 0.0
        %v868 = vmax.f32 %v858, 0.0
        %v869 = vmax.f32 %v859, 0.0
        %v870 = vmax.f32 %v860, 0.0
        %v871 = vmax.f32 %v861, 0.0
        %v872 = vld [vmem:[%s3] sm:$0xff]
        %v873 = vld [vmem:[%s3 + $0x8] sm:$0xff]
        %v874 = vld [vmem:[%s3 + $0x10] sm:$0xff]
        %v875 = vld [vmem:[%s3 + $0x18] sm:$0xff]
        %v876 = vld [vmem:[%s3 + $0x20] sm:$0xff]
        %v877 = vld [vmem:[%s3 + $0x28] sm:$0xff]
        %v878 = vld [vmem:[%s3 + $0x30] sm:$0xff]
        %v879 = vld [vmem:[%s3 + $0x38] sm:$0xff]
        %v880 = vld [vmem:[%s3 + $0x40] sm:$0xff]
        %v881 = vld [vmem:[%s3 + $0x48] sm:$0xff]
        %v882 = vld [vmem:[%s3 + $0x50] sm:$0xff]
        %v883 = vld [vmem:[%s3 + $0x58] sm:$0xff]
        %v884 = vld [vmem:[%s3 + $0x60] sm:$0xff]
        %v885 = vld [vmem:[%s3 + $0x68] sm:$0xff]
        %v886 = vld [vmem:[%s3 + $0x70] sm:$0xff]
        %v887 = vld [vmem:[%s3 + $0x78] sm:$0xff]
        %v888 = vld [vmem:[%s3 + $0x80] sm:$0xff]
        %v889 = vld [vmem:[%s3 + $0x88] sm:$0xff]
        %v890 = vld [vmem:[%s3 + $0x90] sm:$0x3f]
        %v891 = vld [vmem:[%s4] sm:$0xff]
        %v892 = vld [vmem:[%s4 + $0x8] sm:$0xff]
        %v893 = vld [vmem:[%s4 + $0x10] sm:$0xff]
        %v894 = vld [vmem:[%s4 + $0x18] sm:$0xff]
        %v895 = vld [vmem:[%s4 + $0x20] sm:$0xff]
        %v896 = vld [vmem:[%s4 + $0x28] sm:$0xff]
        %v897 = vld [vmem:[%s4 + $0x30] sm:$0xff]
        %v898 = vld [vmem:[%s4 + $0x38] sm:$0xff]
        %v899 = vld [vmem:[%s4 + $0x40] sm:$0xff]
        %v900 = vld [vmem:[%s4 + $0x48] sm:$0xff]
        %v901 = vld [vmem:[%s4 + $0x50] sm:$0xff]
        %v902 = vld [vmem:[%s4 + $0x58] sm:$0xff]
        %v903 = vld [vmem:[%s4 + $0x60] sm:$0xff]
        %v904 = vld [vmem:[%s4 + $0x68] sm:$0xff]
        %v905 = vld [vmem:[%s4 + $0x70] sm:$0xff]
        %v906 = vld [vmem:[%s4 + $0x78] sm:$0xff]
        %v907 = vld [vmem:[%s4 + $0x80] sm:$0xff]
        %v908 = vld [vmem:[%s4 + $0x88] sm:$0xff]
        %v909 = vld [vmem:[%s4 + $0x90] sm:$0x3f]
        %911 = vset.pattern.permute.xlu0 0
        %912 = vperm.xlu0 %911, %v891
        %v913 = vpop.permute.xlu0 %912
        %916 = vset.pattern.permute.xlu0 0
        %917 = vperm.xlu0 %916, %v892
        %v918 = vpop.permute.xlu0 %917
        %921 = vset.pattern.permute.xlu0 0
        %922 = vperm.xlu0 %921, %v893
        %v923 = vpop.permute.xlu0 %922
        %926 = vset.pattern.permute.xlu0 0
        %927 = vperm.xlu0 %926, %v894
        %v928 = vpop.permute.xlu0 %927
        %931 = vset.pattern.permute.xlu0 0
        %932 = vperm.xlu0 %931, %v895
        %v933 = vpop.permute.xlu0 %932
        %936 = vset.pattern.permute.xlu0 0
        %937 = vperm.xlu0 %936, %v896
        %v938 = vpop.permute.xlu0 %937
        %941 = vset.pattern.permute.xlu0 0
        %942 = vperm.xlu0 %941, %v897
        %v943 = vpop.permute.xlu0 %942
        %946 = vset.pattern.permute.xlu0 0
        %947 = vperm.xlu0 %946, %v898
        %v948 = vpop.permute.xlu0 %947
        %951 = vset.pattern.permute.xlu0 0
        %952 = vperm.xlu0 %951, %v899
        %v953 = vpop.permute.xlu0 %952
        %956 = vset.pattern.permute.xlu0 0
        %957 = vperm.xlu0 %956, %v900
        %v958 = vpop.permute.xlu0 %957
        %961 = vset.pattern.permute.xlu0 0
        %962 = vperm.xlu0 %961, %v901
        %v963 = vpop.permute.xlu0 %962
        %966 = vset.pattern.permute.xlu0 0
        %967 = vperm.xlu0 %966, %v902
        %v968 = vpop.permute.xlu0 %967
        %971 = vset.pattern.permute.xlu0 0
        %972 = vperm.xlu0 %971, %v903
        %v973 = vpop.permute.xlu0 %972
        %976 = vset.pattern.permute.xlu0 0
        %977 = vperm.xlu0 %976, %v904
        %v978 = vpop.permute.xlu0 %977
        %981 = vset.pattern.permute.xlu0 0
        %982 = vperm.xlu0 %981, %v905
        %v983 = vpop.permute.xlu0 %982
        %986 = vset.pattern.permute.xlu0 0
        %987 = vperm.xlu0 %986, %v906
        %v988 = vpop.permute.xlu0 %987
        %991 = vset.pattern.permute.xlu0 0
        %992 = vperm.xlu0 %991, %v907
        %v993 = vpop.permute.xlu0 %992
        %996 = vset.pattern.permute.xlu0 0
        %997 = vperm.xlu0 %996, %v908
        %v998 = vpop.permute.xlu0 %997
        %1001 = vset.pattern.permute.xlu0 0
        %1002 = vperm.xlu0 %1001, %v909
        %v1003 = vpop.permute.xlu0 %1002
        %vm1005 = vcmask 326656
        %v1007 = vsel %vm1005, %v872, 0
        %v1010 = vsel %vm1005, %v873, 0
        %v1013 = vsel %vm1005, %v874, 0
        %v1016 = vsel %vm1005, %v875, 0
        %v1019 = vsel %vm1005, %v876, 0
        %v1022 = vsel %vm1005, %v877, 0
        %v1025 = vsel %vm1005, %v878, 0
        %v1028 = vsel %vm1005, %v879, 0
        %v1031 = vsel %vm1005, %v880, 0
        %v1034 = vsel %vm1005, %v881, 0
        %v1037 = vsel %vm1005, %v882, 0
        %v1040 = vsel %vm1005, %v883, 0
        %v1043 = vsel %vm1005, %v884, 0
        %v1046 = vsel %vm1005, %v885, 0
        %v1049 = vsel %vm1005, %v886, 0
        %v1052 = vsel %vm1005, %v887, 0
        %v1055 = vsel %vm1005, %v888, 0
        %v1058 = vsel %vm1005, %v889, 0
        %v1061 = vsel %vm1005, %v890, 0
        %1063 = vmatprep.subr.mxu0 %v863
        %1064 = vmatpush1.msra.mxu0 %v862
        %1065 = vmatprep.subr.mxu0 %v865
        %1066 = vmatpush1.msra.mxu0 %v864
        %1067 = vmatprep.subr.mxu0 %v867
        %1068 = vmatpush1.msra.mxu0 %v866
        %1069 = vmatprep.subr.mxu0 %v869
        %1070 = vmatpush1.msra.mxu0 %v868
        %1071 = vmatprep.subr.mxu0 %v871
        %1072 = vmatpush1.msra.mxu0 %v870
        %1073 = vmatprep.subr.mxu0 0.0
        %1074 = vmatpush1.msra.mxu0 0.0
        %1075 = vmatprep.subr.mxu0 0.0
        %1076 = vmatpush1.msra.mxu0 0.0
        %1077 = vmatprep.subr.mxu0 0.0
        %1078 = vmatpush1.msra.mxu0 0.0
        %1079 = vmatprep.subr.mxu0 0.0
        %1080 = vmatpush1.msra.mxu0 0.0
        %1081 = vmatprep.subr.mxu0 0.0
        %1082 = vmatpush1.msra.mxu0 0.0
        %1083 = vmatprep.subr.mxu0 0.0
        %1084 = vmatpush1.msra.mxu0 0.0
        %1085 = vmatprep.subr.mxu0 0.0
        %1086 = vmatpush1.msra.mxu0 0.0
        %1087 = vmatprep.subr.mxu0 0.0
        %1088 = vmatpush1.msra.mxu0 0.0
        %1089 = vmatprep.subr.mxu0 0.0
        %1090 = vmatpush1.msra.mxu0 0.0
        %1091 = vmatprep.subr.mxu0 0.0
        %1092 = vmatpush1.msra.mxu0 0.0
        %1093 = vmatprep.subr.mxu0 0.0
        %1094 = vmatpush1.msra.mxu0 0.0
        %1095 = vmatprep.subr.mxu0 0.0
        %1096 = vmatpush1.msra.mxu0 0.0
        %1097 = vmatprep.subr.mxu0 0.0
        %1098 = vmatpush1.msra.mxu0 0.0
        %1099 = vmatprep.subr.mxu0 0.0
        %1100 = vmatpush1.msra.mxu0 0.0
        %1101 = vmatprep.subr.mxu0 0.0
        %1102 = vmatpush1.msra.mxu0 0.0
        %1103 = vmatprep.subr.mxu0 0.0
        %1104 = vmatpush1.msra.mxu0 0.0
        %1105 = vmatprep.subr.mxu0 0.0
        %1106 = vmatpush1.msra.mxu0 0.0
        %1107 = vmatprep.subr.mxu0 0.0
        %1108 = vmatpush1.msra.mxu0 0.0
        %1109 = vmatprep.subr.mxu0 0.0
        %1110 = vmatpush1.msra.mxu0 0.0
        %1111 = vmatprep.subr.mxu0 0.0
        %1112 = vmatpush1.msra.mxu0 0.0
        %1113 = vmatprep.subr.mxu0 0.0
        %1114 = vmatpush1.msra.mxu0 0.0
        %1115 = vmatprep.subr.mxu0 0.0
        %1116 = vmatpush1.msra.mxu0 0.0
        %1117 = vmatprep.subr.mxu0 0.0
        %1118 = vmatpush1.msra.mxu0 0.0
        %1119 = vmatprep.subr.mxu0 0.0
        %1120 = vmatpush1.msra.mxu0 0.0
        %1121 = vmatprep.subr.mxu0 0.0
        %1122 = vmatpush1.msra.mxu0 0.0
        %1123 = vmatprep.subr.mxu0 0.0
        %1124 = vmatpush1.msra.mxu0 0.0
        %1125 = vmatprep.subr.mxu0 0.0
        %1126 = vmatpush1.msra.mxu0 0.0
        %1127 = vmatprep.mubr.f32.mxu0 0.0
        %1128 = vmatmul.mubr.f32.gmra.mrb[0].mxu0 %v1007
        %v1129 = vpop.f32.mrb[0].mxu0
        %v1130 = vadd.f32 %v913, %v1129
        %v1131 = vpop.f32.mrb[0].mxu0
        %v1132 = vadd.f32 %v913, %v1131
        %1133 = vmatprep.mubr.f32.mxu0 0.0
        %1134 = vmatmul.mubr.f32.gmra.mrb[0].mxu0 %v1010
        %v1135 = vpop.f32.mrb[0].mxu0
        %v1136 = vadd.f32 %v918, %v1135
        %v1137 = vpop.f32.mrb[0].mxu0
        %v1138 = vadd.f32 %v918, %v1137
        %1139 = vmatprep.mubr.f32.mxu0 0.0
        %1140 = vmatmul.mubr.f32.gmra.mrb[0].mxu0 %v1013
        %v1141 = vpop.f32.mrb[0].mxu0
        %v1142 = vadd.f32 %v923, %v1141
        %v1143 = vpop.f32.mrb[0].mxu0
        %v1144 = vadd.f32 %v923, %v1143
        %1145 = vmatprep.mubr.f32.mxu0 0.0
        %1146 = vmatmul.mubr.f32.gmra.mrb[0].mxu0 %v1016
        %v1147 = vpop.f32.mrb[0].mxu0
        %v1148 = vadd.f32 %v928, %v1147
        %v1149 = vpop.f32.mrb[0].mxu0
        %v1150 = vadd.f32 %v928, %v1149
        %1151 = vmatprep.mubr.f32.mxu0 0.0
        %1152 = vmatmul.mubr.f32.gmra.mrb[0].mxu0 %v1019
        %v1153 = vpop.f32.mrb[0].mxu0
        %v1154 = vadd.f32 %v933, %v1153
        %v1155 = vpop.f32.mrb[0].mxu0
        %v1156 = vadd.f32 %v933, %v1155
        %1157 = vmatprep.mubr.f32.mxu0 0.0
        %1158 = vmatmul.mubr.f32.gmra.mrb[0].mxu0 %v1022
        %v1159 = vpop.f32.mrb[0].mxu0
        %v1160 = vadd.f32 %v938, %v1159
        %v1161 = vpop.f32.mrb[0].mxu0
        %v1162 = vadd.f32 %v938, %v1161
        %1163 = vmatprep.mubr.f32.mxu0 0.0
        %1164 = vmatmul.mubr.f32.gmra.mrb[0].mxu0 %v1025
        %v1165 = vpop.f32.mrb[0].mxu0
        %v1166 = vadd.f32 %v943, %v1165
        %v1167 = vpop.f32.mrb[0].mxu0
        %v1168 = vadd.f32 %v943, %v1167
        %1169 = vmatprep.mubr.f32.mxu0 0.0
        %1170 = vmatmul.mubr.f32.gmra.mrb[0].mxu0 %v1028
        %v1171 = vpop.f32.mrb[0].mxu0
        %v1172 = vadd.f32 %v948, %v1171
        %v1173 = vpop.f32.mrb[0].mxu0
        %v1174 = vadd.f32 %v948, %v1173
        %1175 = vmatprep.mubr.f32.mxu0 0.0
        %1176 = vmatmul.mubr.f32.gmra.mrb[0].mxu0 %v1031
        %v1177 = vpop.f32.mrb[0].mxu0
        %v1178 = vadd.f32 %v953, %v1177
        %v1179 = vpop.f32.mrb[0].mxu0
        %v1180 = vadd.f32 %v953, %v1179
        %1181 = vmatprep.mubr.f32.mxu0 0.0
        %1182 = vmatmul.mubr.f32.gmra.mrb[0].mxu0 %v1034
        %v1183 = vpop.f32.mrb[0].mxu0
        %v1184 = vadd.f32 %v958, %v1183
        %v1185 = vpop.f32.mrb[0].mxu0
        %v1186 = vadd.f32 %v958, %v1185
        %1187 = vmatprep.mubr.f32.mxu0 0.0
        %1188 = vmatmul.mubr.f32.gmra.mrb[0].mxu0 %v1037
        %v1189 = vpop.f32.mrb[0].mxu0
        %v1190 = vadd.f32 %v963, %v1189
        %v1191 = vpop.f32.mrb[0].mxu0
        %v1192 = vadd.f32 %v963, %v1191
        %1193 = vmatprep.mubr.f32.mxu0 0.0
        %1194 = vmatmul.mubr.f32.gmra.mrb[0].mxu0 %v1040
        %v1195 = vpop.f32.mrb[0].mxu0
        %v1196 = vadd.f32 %v968, %v1195
        %v1197 = vpop.f32.mrb[0].mxu0
        %v1198 = vadd.f32 %v968, %v1197
        %1199 = vmatprep.mubr.f32.mxu0 0.0
        %1200 = vmatmul.mubr.f32.gmra.mrb[0].mxu0 %v1043
        %v1201 = vpop.f32.mrb[0].mxu0
        %v1202 = vadd.f32 %v973, %v1201
        %v1203 = vpop.f32.mrb[0].mxu0
        %v1204 = vadd.f32 %v973, %v1203
        %1205 = vmatprep.mubr.f32.mxu0 0.0
        %1206 = vmatmul.mubr.f32.gmra.mrb[0].mxu0 %v1046
        %v1207 = vpop.f32.mrb[0].mxu0
        %v1208 = vadd.f32 %v978, %v1207
        %v1209 = vpop.f32.mrb[0].mxu0
        %v1210 = vadd.f32 %v978, %v1209
        %1211 = vmatprep.mubr.f32.mxu0 0.0
        %1212 = vmatmul.mubr.f32.gmra.mrb[0].mxu0 %v1049
        %v1213 = vpop.f32.mrb[0].mxu0
        %v1214 = vadd.f32 %v983, %v1213
        %v1215 = vpop.f32.mrb[0].mxu0
        %v1216 = vadd.f32 %v983, %v1215
        %1217 = vmatprep.mubr.f32.mxu0 0.0
        %1218 = vmatmul.mubr.f32.gmra.mrb[0].mxu0 %v1052
        %v1219 = vpop.f32.mrb[0].mxu0
        %v1220 = vadd.f32 %v988, %v1219
        %v1221 = vpop.f32.mrb[0].mxu0
        %v1222 = vadd.f32 %v988, %v1221
        %1223 = vmatprep.mubr.f32.mxu0 0.0
        %1224 = vmatmul.mubr.f32.gmra.mrb[0].mxu0 %v1055
        %v1225 = vpop.f32.mrb[0].mxu0
        %v1226 = vadd.f32 %v993, %v1225
        %v1227 = vpop.f32.mrb[0].mxu0
        %v1228 = vadd.f32 %v993, %v1227
        %1229 = vmatprep.mubr.f32.mxu0 0.0
        %1230 = vmatmul.mubr.f32.gmra.mrb[0].mxu0 %v1058
        %v1231 = vpop.f32.mrb[0].mxu0
        %v1232 = vadd.f32 %v998, %v1231
        %v1233 = vpop.f32.mrb[0].mxu0
        %v1234 = vadd.f32 %v998, %v1233
        %1235 = vmatprep.mubr.f32.mxu0 0.0
        %1236 = vmatmul.mubr.f32.gmra.mrb[0].mxu0 %v1061
        %v1237 = vpop.f32.mrb[0].mxu0
        %v1238 = vadd.f32 %v1003, %v1237
        %v1239 = vpop.f32.mrb[0].mxu0
        %v1240 = vadd.f32 %v1003, %v1239
        %1241 = vdwg.mxu0
        %v1242 = vmax.f32 %v1130, 0.0
        %v1243 = vmax.f32 %v1132, 0.0
        %v1244 = vmax.f32 %v1136, 0.0
        %v1245 = vmax.f32 %v1138, 0.0
        %v1246 = vmax.f32 %v1142, 0.0
        %v1247 = vmax.f32 %v1144, 0.0
        %v1248 = vmax.f32 %v1148, 0.0
        %v1249 = vmax.f32 %v1150, 0.0
        %v1250 = vmax.f32 %v1154, 0.0
        %v1251 = vmax.f32 %v1156, 0.0
        %v1252 = vmax.f32 %v1160, 0.0
        %v1253 = vmax.f32 %v1162, 0.0
        %v1254 = vmax.f32 %v1166, 0.0
        %v1255 = vmax.f32 %v1168, 0.0
        %v1256 = vmax.f32 %v1172, 0.0
        %v1257 = vmax.f32 %v1174, 0.0
        %v1258 = vmax.f32 %v1178, 0.0
        %v1259 = vmax.f32 %v1180, 0.0
        %v1260 = vmax.f32 %v1184, 0.0
        %v1261 = vmax.f32 %v1186, 0.0
        %v1262 = vmax.f32 %v1190, 0.0
        %v1263 = vmax.f32 %v1192, 0.0
        %v1264 = vmax.f32 %v1196, 0.0
        %v1265 = vmax.f32 %v1198, 0.0
        %v1266 = vmax.f32 %v1202, 0.0
        %v1267 = vmax.f32 %v1204, 0.0
        %v1268 = vmax.f32 %v1208, 0.0
        %v1269 = vmax.f32 %v1210, 0.0
        %v1270 = vmax.f32 %v1214, 0.0
        %v1271 = vmax.f32 %v1216, 0.0
        %v1272 = vmax.f32 %v1220, 0.0
        %v1273 = vmax.f32 %v1222, 0.0
        %v1274 = vmax.f32 %v1226, 0.0
        %v1275 = vmax.f32 %v1228, 0.0
        %v1276 = vmax.f32 %v1232, 0.0
        %v1277 = vmax.f32 %v1234, 0.0
        %v1278 = vmax.f32 %v1238, 0.0
        %v1279 = vmax.f32 %v1240, 0.0
        %v1280 = vld [vmem:[%s5] sm:$0xff]
        %v1281 = vld [vmem:[%s5 + $0x8] sm:$0xff]
        %v1282 = vld [vmem:[%s5 + $0x10] sm:$0x3]
        %v1283 = vld [vmem:[%s5 + $0x18] sm:$0x3]
        %vm1284 = vcmask 179200
        %v1286 = vsel %vm1284, %v1281, 0
        %v1289 = vsel %vm1284, %v1283, 0
        %vm1291 = vcmask 1045504
        %v1293 = vsel %vm1291, %v1278, 0
        %v1296 = vsel %vm1291, %v1279, 0
        %1298 = vmatprep.subr.mxu0 %v1243
        %1299 = vmatpush1.msra.mxu0 %v1242
        %1300 = vmatprep.subr.mxu0 %v1245
        %1301 = vmatpush1.msra.mxu0 %v1244
        %1302 = vmatprep.subr.mxu0 %v1247
        %1303 = vmatpush1.msra.mxu0 %v1246
        %1304 = vmatprep.subr.mxu0 %v1249
        %1305 = vmatpush1.msra.mxu0 %v1248
        %1306 = vmatprep.subr.mxu0 %v1251
        %1307 = vmatpush1.msra.mxu0 %v1250
        %1308 = vmatprep.subr.mxu0 %v1253
        %1309 = vmatpush1.msra.mxu0 %v1252
        %1310 = vmatprep.subr.mxu0 %v1255
        %1311 = vmatpush1.msra.mxu0 %v1254
        %1312 = vmatprep.subr.mxu0 %v1257
        %1313 = vmatpush1.msra.mxu0 %v1256
        %1314 = vmatprep.subr.mxu0 %v1259
        %1315 = vmatpush1.msra.mxu0 %v1258
        %1316 = vmatprep.subr.mxu0 %v1261
        %1317 = vmatpush1.msra.mxu0 %v1260
        %1318 = vmatprep.subr.mxu0 %v1263
        %1319 = vmatpush1.msra.mxu0 %v1262
        %1320 = vmatprep.subr.mxu0 %v1265
        %1321 = vmatpush1.msra.mxu0 %v1264
        %1322 = vmatprep.subr.mxu0 %v1267
        %1323 = vmatpush1.msra.mxu0 %v1266
        %1324 = vmatprep.subr.mxu0 %v1269
        %1325 = vmatpush1.msra.mxu0 %v1268
        %1326 = vmatprep.subr.mxu0 %v1271
        %1327 = vmatpush1.msra.mxu0 %v1270
        %1328 = vmatprep.subr.mxu0 %v1273
        %1329 = vmatpush1.msra.mxu0 %v1272
        %1330 = vmatprep.subr.mxu0 %v1275
        %1331 = vmatpush1.msra.mxu0 %v1274
        %1332 = vmatprep.subr.mxu0 %v1277
        %1333 = vmatpush1.msra.mxu0 %v1276
        %1334 = vmatprep.subr.mxu0 %v1296
        %1335 = vmatpush1.msra.mxu0 %v1293
        %1336 = vmatprep.subr.mxu0 0.0
        %1337 = vmatpush1.msra.mxu0 0.0
        %1338 = vmatprep.subr.mxu0 0.0
        %1339 = vmatpush1.msra.mxu0 0.0
        %1340 = vmatprep.subr.mxu0 0.0
        %1341 = vmatpush1.msra.mxu0 0.0
        %1342 = vmatprep.subr.mxu0 0.0
        %1343 = vmatpush1.msra.mxu0 0.0
        %1344 = vmatprep.subr.mxu0 0.0
        %1345 = vmatpush1.msra.mxu0 0.0
        %1346 = vmatprep.subr.mxu0 0.0
        %1347 = vmatpush1.msra.mxu0 0.0
        %1348 = vmatprep.subr.mxu0 0.0
        %1349 = vmatpush1.msra.mxu0 0.0
        %1350 = vmatprep.subr.mxu0 0.0
        %1351 = vmatpush1.msra.mxu0 0.0
        %1352 = vmatprep.subr.mxu0 0.0
        %1353 = vmatpush1.msra.mxu0 0.0
        %1354 = vmatprep.subr.mxu0 0.0
        %1355 = vmatpush1.msra.mxu0 0.0
        %1356 = vmatprep.subr.mxu0 0.0
        %1357 = vmatpush1.msra.mxu0 0.0
        %1358 = vmatprep.subr.mxu0 0.0
        %1359 = vmatpush1.msra.mxu0 0.0
        %1360 = vmatprep.subr.mxu0 0.0
        %1361 = vmatpush1.msra.mxu0 0.0
        %1362 = vmatprep.mubr.f32.mxu0 %v1286
        %1363 = vmatmul.mubr.f32.gmra.mrb[0].mxu0 %v1280
        %v1364 = vpop.f32.mrb[0].mxu0
        %v1365 = vadd.f32 0.0, %v1364
        %v1366 = vpop.f32.mrb[0].mxu0
        %v1367 = vadd.f32 0.0, %v1366
        %1368 = vmatprep.mubr.f32.mxu0 %v1289
        %1369 = vmatmul.mubr.f32.gmra.mrb[0].mxu0 %v1282
        %v1370 = vpop.f32.mrb[0].mxu0
        %v1371 = vadd.f32 0.0, %v1370
        %v1372 = vpop.f32.mrb[0].mxu0
        %v1373 = vadd.f32 0.0, %v1372
        %1374 = vdwg.mxu0
        %v1375 = vadd.f32 %v1365, %v1367
        %1376 = vadd.xlane.f32.xlu0 %v1375
        %v1377 = vpop.xlane.xlu0 %1376
        %vm1378 = vcmask 1041408
        %v1379 = vsel %vm1378, %v1371, 0.0
        %v1380 = vsel %vm1378, %v1373, 0.0
        %v1381 = vadd.f32 %v1379, %v1380
        %1382 = vadd.xlane.f32.xlu0 %v1381
        %v1383 = vpop.xlane.xlu0 %1382
        %v1384 = vmul.f32 %v1377, 0.00390625
        %v1385 = vmul.f32 %v1383, 0.00390625
        %v1386 = vld [vmem:[%s6] sm:$0xff]
        %v1387 = vld [vmem:[%s6 + $0x8] sm:$0x3]
        %v1388 = vadd.f32 %v1384, %v1386
        %v1389 = vadd.f32 %v1385, %v1387
        %vm1390 = vcmask 7168
        %1391 = vst.msk [vmem:[%s293] sm:$0xff] %vm1390, %v1388
        %vm1392 = vcmask 1024
        %1393 = vst.msk [vmem:[%s293 + $0x8] sm:$0x3] %vm1392, %v1389
        %p1394 = scmp.lt.s32.totalorder %s19, 1
        %s1395 = scalar_select %p1394, %s19, 1
        %s1396 = smul.addr %s1395, 2
        %s1397 = smul.addr %s1396, 8
        %s1398 = scalar_lea.vmem %s7, %s1397
        // Predicated region
        $region53: #{tpu_custom_call.1} parent=47 // pred_check
          %p1399 = pneg %p189
        $region54: #{tpu_custom_call.1} parent=47 // pred_check_branch
          %1401 = sbr.rel (%p1399) target = $region56
        $region55: #{tpu_custom_call.1} parent=47 // pred_region
          _
        $region56: #{tpu_custom_call.1} parent=47 // pred_fallthru
          _
      $region48: #{tpu_custom_call.1} parent=5 // pred_fallthru
        _
      %p1402 = scmp.le.s32.totalorder 2, %s14
      // Predicated region
      $region57: #{tpu_custom_call.1} parent=5 // pred_check
        %p1403 = pneg %p1402
      $region58: #{tpu_custom_call.1} parent=5 // pred_check_branch
        %1405 = sbr.rel (%p1403) target = $region60
      $region59: #{tpu_custom_call.1} parent=5 // pred_region
        %s1406 = ssub.s32 %s14, 2
        // Predicated region
        $region61: #{tpu_custom_call.1} parent=59 // pred_check
          %p1407 = pneg %p195
        $region62: #{tpu_custom_call.1} parent=59 // pred_check_branch
          %1409 = sbr.rel (%p1407) target = $region64
        $region63: #{tpu_custom_call.1} parent=59 // pred_region
          %p1410 = scmp.lt.s32.totalorder %s20, 1
          %s1411 = scalar_select %p1410, %s20, 1
          %s1412 = smul.addr %s1411, 2
          %s1413 = smul.addr %s1412, 8
          %s1414 = scalar_lea.vmem %s7, %s1413
        $region64: #{tpu_custom_call.1} parent=59 // pred_fallthru
          _
      $region60: #{tpu_custom_call.1} parent=5 // pred_fallthru
        _
    $region6: #{tpu_custom_call.1} parent=1 // loop_footer
      %s18 = sadd.s32 1, %s14
    $region7: #{tpu_custom_call.1} parent=1 // loop_footer_branch
      %13 = sbr.rel target = $region3
    $region8: #{tpu_custom_call.1} parent=1 // loop_exit
      _
    %1415 = vsyncpa [#allocation3], 1
    %s1416 = scalar_lea.sflag [#allocation3], 1
    %1417 = vsyncpa %s1416, 1

</llo_original>
